<compile_context>
chip_gen: v6e
topology: v6e:2x2x1
jax: 0.10.0
libtpu: 0.0.40
codegen_flags: <defaults>
</compile_context>

<pallas_src>
import numpy as np
import jax
import jax.numpy as jnp
from jax.experimental import pallas as pl
from jax.experimental.pallas import tpu as pltpu


def _identity_kernel(x_ref, o_ref):
    # Pure passthrough: load the current VMEM tile and store it unchanged.
    o_ref[...] = x_ref[...]


def _device_params():
    """Return (block_bytes, num_tensorcores) tuned per TPU generation."""
    try:
        kind = jax.devices()[0].device_kind.lower()
    except Exception:
        kind = ""
    if "v7" in kind:
        # v7x: 32 MiB scoped-VMEM default (64 MiB physical), 2 TCs/chip.
        return 4 << 20, 2
    if "v6" in kind:
        # v6e: 32 MiB scoped-VMEM default, 1 TC.
        return 4 << 20, 1
    # v5e/v5p/unknown: stay conservative under v5e's 16 MiB scoped default.
    return 2 << 20, 1


def _pick_lane(total: int) -> int:
    """Largest multiple of 128 (<= 8192) dividing `total`; 0 if none exists."""
    start = min(8192, total) // 128 * 128
    for cand in range(start, 0, -128):
        if total % cand == 0:
            return cand
    return 0


def _pick_bm(rows: int, lane: int, itemsize: int, block_bytes: int,
             num_cores: int) -> int:
    """Block height: dtype-aware sublane multiple, VMEM-bounded, tail-free."""
    # Packed-sublane multiple: 8 for 32-bit, 16 for bf16/fp16, 32 for int8/fp8.
    sub = 8 * max(1, 4 // itemsize)
    bm_cap = (block_bytes // (lane * itemsize)) // sub * sub
    bm_cap = max(bm_cap, sub)
    # v7x only: guarantee >= 2 grid steps so the "parallel" axis can shard the
    # copy across both TensorCores.  No effect on single-TC chips.
    if num_cores > 1 and rows >= 2 * sub:
        bm_cap = min(bm_cap, max((rows // 2) // sub * sub, sub))
    if rows <= bm_cap:
        return rows  # full extent always satisfies the (8, 128) rule
    # Prefer a block height that divides rows exactly -> no masked tail block.
    d = (bm_cap // sub) * sub
    while d >= sub:
        if rows % d == 0:
            return d
        d -= sub
    return bm_cap  # fallback: last block becomes a masked partial store


def no_ihc(x: jax.Array) -> jax.Array:
    """Identity IHC: returns the input unchanged (bandwidth-tuned Pallas copy).

    Note: the input is NOT aliased with the output, so `x` remains valid after
    the call and no defensive HBM copy is inserted by XLA.
    """
    total = x.size
    if total == 0:
        return x
    itemsize = x.dtype.itemsize

    lane = _pick_lane(total)
    if lane == 0:
        # Element count not a multiple of 128: for an identity, returning the
        # input is bitwise exact and strictly cheaper than any copy kernel.
        # TODO(synk): no kernel is launched on this path (pure no-op).
        return x

    rows = total // lane
    block_bytes, num_cores = _device_params()
    bm = _pick_bm(rows, lane, itemsize, block_bytes, num_cores)
    grid = (pl.cdiv(rows, bm),)

    x2d = x.reshape(rows, lane)  # contiguous reshape: layout plumbing only

    y2d = pl.pallas_call(
        _identity_kernel,
        out_shape=jax.ShapeDtypeStruct((rows, lane), x.dtype),
        grid_spec=pltpu.PrefetchScalarGridSpec(
            num_scalar_prefetch=0,
            grid=grid,
            in_specs=[pl.BlockSpec((bm, lane), lambda i: (i, 0))],
            out_specs=pl.BlockSpec((bm, lane), lambda i: (i, 0)),
        ),
        cost_estimate=pl.CostEstimate(
            flops=0, transcendentals=0, bytes_accessed=2 * total * itemsize
        ),
        compiler_params=pltpu.CompilerParams(
            dimension_semantics=("parallel",),
        ),
    )(x2d)

    return y2d.reshape(x.shape)


if __name__ == "__main__":
    key = jax.random.PRNGKey(0)
    k1, k2, k3 = jax.random.split(key, 3)

    # (B, C, T_sub, T_lane): batch=2, auditory channels=4, time folded into
    # TPU-tile-friendly trailing dims.  2 MiB f32 -> lane-dense multi-step copy.
    x32 = jax.random.normal(k1, (2, 4, 512, 128), dtype=jnp.float32)
    y32 = no_ihc(x32)
    jax.block_until_ready(y32)
    assert y32.shape == x32.shape and y32.dtype == x32.dtype
    assert np.array_equal(np.asarray(y32), np.asarray(x32))

    # bf16 input: exercises the packed-sublane (multiple-of-16) rounding path.
    x16 = jax.random.normal(k2, (2, 4, 384, 128), dtype=jnp.bfloat16)
    y16 = no_ihc(x16)
    jax.block_until_ready(y16)
    assert y16.shape == x16.shape and y16.dtype == x16.dtype
    assert np.array_equal(np.asarray(y16), np.asarray(x16))

    # Awkward element count (not a multiple of 128): bitwise no-op fallback.
    xodd = jax.random.normal(k3, (3, 5, 7), dtype=jnp.float32)
    yodd = no_ihc(xodd)
    jax.block_until_ready(yodd)
    assert np.array_equal(np.asarray(yodd), np.asarray(xodd))

    print("KERNEL_OK")
</pallas_src>

<mosaic_0001>
module attributes {stable_mosaic.version = 11 : i64} {
  func.func @_identity_kernel(%arg0: i32, %arg1: memref<64x8192xf32, #tpu.memory_space<vmem>>, %arg2: memref<64x8192xf32, #tpu.memory_space<vmem>>) attributes {dimension_semantics = [#tpu.dimension_semantics<parallel>], iteration_bounds = array<i64: 1>, scalar_prefetch = 0 : i64, scratch_operands = 0 : i64, tpu.core_type = #tpu.core_type<tc>, window_params = [{transform_indices = @transform_0, window_bounds = array<i64: 64, 8192>}, {transform_indices = @transform_1, window_bounds = array<i64: 64, 8192>}]} {
    %c0 = arith.constant 0 : index
    %c0_0 = arith.constant 0 : index
    %0 = vector.load %arg1[%c0, %c0_0] : memref<64x8192xf32, #tpu.memory_space<vmem>>, vector<64x8192xf32>
    %c0_1 = arith.constant 0 : index
    %c0_2 = arith.constant 0 : index
    %1 = vector.load %arg2[%c0_1, %c0_2] : memref<64x8192xf32, #tpu.memory_space<vmem>>, vector<64x8192xf32>
    tpu.vector_store %arg2[%c0_1, %c0_2], %0 {strides = array<i32>} : memref<64x8192xf32, #tpu.memory_space<vmem>>, vector<64x8192xf32>,
    return
  }
  func.func @transform_0(%arg0: i32) -> (i32, i32) {
    %c0_i32 = arith.constant 0 : i32
    %c0_i32_0 = arith.constant 0 : i32
    return %arg0, %c0_i32 : i32, i32
  }
  func.func @transform_1(%arg0: i32) -> (i32, i32) {
    %c0_i32 = arith.constant 0 : i32
    %c0_i32_0 = arith.constant 0 : i32
    return %arg0, %c0_i32 : i32, i32
  }
}

</mosaic_0001>

<llo_original>
// kernel: tpu_custom_call.1
$region0: #{tpu_custom_call.1}
  #allocation0 [shape = 'u32[]', space=smem, size = 0x4, offset = 0x4, fixed_abs, tag = 'smem constant byte address 0x4 - core index']
  #allocation1 [shape = 'u32[144,128]{1,0:T(1,128)}', space=vmem, size = 0x12000, scoped, tag = 'internal scratch']
  %s0 = inlined_call_operand.hbm [shape: f32[64,8192], index: 0, kind: input, shape index: {}]
  %s1 = inlined_call_operand.hbm [shape: f32[64,8192], index: 1, kind: output, shape index: {}]
  %s2 = sld [smem:[#allocation0]]
  $region18: #{tpu_custom_call.1} parent=0
    _
  %s4 = ssub.s32 1, %s2
  %s5 = scalar_select 0, %s4, %s2
  $region1: #{tpu_custom_call.1} parent=0
    #allocation2 [shape = 'u8[2097152]{0}', space=vmem, size = 0x200000, scoped, tag = 'input window, operand 0, single buffered']
    #allocation3 [shape = 's32[1]{0}', space=sflag, size = 0x4, scoped, tag = 'scoped memory for tpu_custom_call.1']
    #allocation4 [shape = 's32[1]{0}', space=sflag, size = 0x4, scoped, tag = 'scoped memory for tpu_custom_call.1']
    #allocation5 [shape = 'u8[2097152]{0}', space=vmem, size = 0x200000, scoped, tag = 'output window, operand 0, single buffered']
    %6 = vsyncpa [#allocation3], 0
    %7 = vsyncpa [#allocation4], 0
    // Predicated region
    $region2: #{tpu_custom_call.1} parent=1 // pred_check
      _
    $region3: #{tpu_custom_call.1} parent=1 // pred_check_branch
      %9 = sbr.rel (0) target = $region5
    $region4: #{tpu_custom_call.1} parent=1 // pred_region
      %s11 = ssub.s32 65536, 65536
      %12 = vsyncadd [#allocation3], %s11
      %s13 = sshll.u32 [#allocation2], 4
      %s14 = int_to_ptr.vmem [resolvable:$true] %s13
      %19 = dma.hbm_to_vmem [thread:$0]  %s0, 65536, %s14, [#allocation3], 8192, 8192, 512
    $region5: #{tpu_custom_call.1} parent=1 // pred_fallthru
      _
    // Predicated region
    $region6: #{tpu_custom_call.1} parent=1 // pred_check
      _
    $region7: #{tpu_custom_call.1} parent=1 // pred_check_branch
      %21 = sbr.rel (0) target = $region9
    $region8: #{tpu_custom_call.1} parent=1 // pred_region
      %22 = dma.done [#allocation3], 65536
    $region9: #{tpu_custom_call.1} parent=1 // pred_fallthru
      _
    %v23 = vld [vmem:[#allocation2] sm:$0xff]
    %v24 = vld [vmem:[#allocation2 + $0x8] sm:$0xff]
    %v25 = vld [vmem:[#allocation2 + $0x10] sm:$0xff]
    %v26 = vld [vmem:[#allocation2 + $0x18] sm:$0xff]
    %v27 = vld [vmem:[#allocation2 + $0x20] sm:$0xff]
    %v28 = vld [vmem:[#allocation2 + $0x28] sm:$0xff]
    %v29 = vld [vmem:[#allocation2 + $0x30] sm:$0xff]
    %v30 = vld [vmem:[#allocation2 + $0x38] sm:$0xff]
    %v31 = vld [vmem:[#allocation2 + $0x40] sm:$0xff]
    %v32 = vld [vmem:[#allocation2 + $0x48] sm:$0xff]
    %v33 = vld [vmem:[#allocation2 + $0x50] sm:$0xff]
    %v34 = vld [vmem:[#allocation2 + $0x58] sm:$0xff]
    %v35 = vld [vmem:[#allocation2 + $0x60] sm:$0xff]
    %v36 = vld [vmem:[#allocation2 + $0x68] sm:$0xff]
    %v37 = vld [vmem:[#allocation2 + $0x70] sm:$0xff]
    %v38 = vld [vmem:[#allocation2 + $0x78] sm:$0xff]
    %v39 = vld [vmem:[#allocation2 + $0x80] sm:$0xff]
    %v40 = vld [vmem:[#allocation2 + $0x88] sm:$0xff]
    %v41 = vld [vmem:[#allocation2 + $0x90] sm:$0xff]
    %v42 = vld [vmem:[#allocation2 + $0x98] sm:$0xff]
    %v43 = vld [vmem:[#allocation2 + $0xa0] sm:$0xff]
    %v44 = vld [vmem:[#allocation2 + $0xa8] sm:$0xff]
    %v45 = vld [vmem:[#allocation2 + $0xb0] sm:$0xff]
    %v46 = vld [vmem:[#allocation2 + $0xb8] sm:$0xff]
    %v47 = vld [vmem:[#allocation2 + $0xc0] sm:$0xff]
    %v48 = vld [vmem:[#allocation2 + $0xc8] sm:$0xff]
    %v49 = vld [vmem:[#allocation2 + $0xd0] sm:$0xff]
    %v50 = vld [vmem:[#allocation2 + $0xd8] sm:$0xff]
    %v51 = vld [vmem:[#allocation2 + $0xe0] sm:$0xff]
    %v52 = vld [vmem:[#allocation2 + $0xe8] sm:$0xff]
    %v53 = vld [vmem:[#allocation2 + $0xf0] sm:$0xff]
    %v54 = vld [vmem:[#allocation2 + $0xf8] sm:$0xff]
    %v55 = vld [vmem:[#allocation2 + $0x100] sm:$0xff]
    %v56 = vld [vmem:[#allocation2 + $0x108] sm:$0xff]
    %v57 = vld [vmem:[#allocation2 + $0x110] sm:$0xff]
    %v58 = vld [vmem:[#allocation2 + $0x118] sm:$0xff]
    %v59 = vld [vmem:[#allocation2 + $0x120] sm:$0xff]
    %v60 = vld [vmem:[#allocation2 + $0x128] sm:$0xff]
    %v61 = vld [vmem:[#allocation2 + $0x130] sm:$0xff]
    %v62 = vld [vmem:[#allocation2 + $0x138] sm:$0xff]
    %v63 = vld [vmem:[#allocation2 + $0x140] sm:$0xff]
    %v64 = vld [vmem:[#allocation2 + $0x148] sm:$0xff]
    %v65 = vld [vmem:[#allocation2 + $0x150] sm:$0xff]
    %v66 = vld [vmem:[#allocation2 + $0x158] sm:$0xff]
    %v67 = vld [vmem:[#allocation2 + $0x160] sm:$0xff]
    %v68 = vld [vmem:[#allocation2 + $0x168] sm:$0xff]
    %v69 = vld [vmem:[#allocation2 + $0x170] sm:$0xff]
    %v70 = vld [vmem:[#allocation2 + $0x178] sm:$0xff]
    %v71 = vld [vmem:[#allocation2 + $0x180] sm:$0xff]
    %v72 = vld [vmem:[#allocation2 + $0x188] sm:$0xff]
    %v73 = vld [vmem:[#allocation2 + $0x190] sm:$0xff]
    %v74 = vld [vmem:[#allocation2 + $0x198] sm:$0xff]
    %v75 = vld [vmem:[#allocation2 + $0x1a0] sm:$0xff]
    %v76 = vld [vmem:[#allocation2 + $0x1a8] sm:$0xff]
    %v77 = vld [vmem:[#allocation2 + $0x1b0] sm:$0xff]
    %v78 = vld [vmem:[#allocation2 + $0x1b8] sm:$0xff]
    %v79 = vld [vmem:[#allocation2 + $0x1c0] sm:$0xff]
    %v80 = vld [vmem:[#allocation2 + $0x1c8] sm:$0xff]
    %v81 = vld [vmem:[#allocation2 + $0x1d0] sm:$0xff]
    %v82 = vld [vmem:[#allocation2 + $0x1d8] sm:$0xff]
    %v83 = vld [vmem:[#allocation2 + $0x1e0] sm:$0xff]
    %v84 = vld [vmem:[#allocation2 + $0x1e8] sm:$0xff]
    %v85 = vld [vmem:[#allocation2 + $0x1f0] sm:$0xff]
    %v86 = vld [vmem:[#allocation2 + $0x1f8] sm:$0xff]
    %v87 = vld [vmem:[#allocation2 + $0x200] sm:$0xff]
    %v88 = vld [vmem:[#allocation2 + $0x208] sm:$0xff]
    %v89 = vld [vmem:[#allocation2 + $0x210] sm:$0xff]
    %v90 = vld [vmem:[#allocation2 + $0x218] sm:$0xff]
    %v91 = vld [vmem:[#allocation2 + $0x220] sm:$0xff]
    %v92 = vld [vmem:[#allocation2 + $0x228] sm:$0xff]
    %v93 = vld [vmem:[#allocation2 + $0x230] sm:$0xff]
    %v94 = vld [vmem:[#allocation2 + $0x238] sm:$0xff]
    %v95 = vld [vmem:[#allocation2 + $0x240] sm:$0xff]
    %v96 = vld [vmem:[#allocation2 + $0x248] sm:$0xff]
    %v97 = vld [vmem:[#allocation2 + $0x250] sm:$0xff]
    %v98 = vld [vmem:[#allocation2 + $0x258] sm:$0xff]
    %v99 = vld [vmem:[#allocation2 + $0x260] sm:$0xff]
    %v100 = vld [vmem:[#allocation2 + $0x268] sm:$0xff]
    %v101 = vld [vmem:[#allocation2 + $0x270] sm:$0xff]
    %v102 = vld [vmem:[#allocation2 + $0x278] sm:$0xff]
    %v103 = vld [vmem:[#allocation2 + $0x280] sm:$0xff]
    %v104 = vld [vmem:[#allocation2 + $0x288] sm:$0xff]
    %v105 = vld [vmem:[#allocation2 + $0x290] sm:$0xff]
    %v106 = vld [vmem:[#allocation2 + $0x298] sm:$0xff]
    %v107 = vld [vmem:[#allocation2 + $0x2a0] sm:$0xff]
    %v108 = vld [vmem:[#allocation2 + $0x2a8] sm:$0xff]
    %v109 = vld [vmem:[#allocation2 + $0x2b0] sm:$0xff]
    %v110 = vld [vmem:[#allocation2 + $0x2b8] sm:$0xff]
    %v111 = vld [vmem:[#allocation2 + $0x2c0] sm:$0xff]
    %v112 = vld [vmem:[#allocation2 + $0x2c8] sm:$0xff]
    %v113 = vld [vmem:[#allocation2 + $0x2d0] sm:$0xff]
    %v114 = vld [vmem:[#allocation2 + $0x2d8] sm:$0xff]
    %v115 = vld [vmem:[#allocation2 + $0x2e0] sm:$0xff]
    %v116 = vld [vmem:[#allocation2 + $0x2e8] sm:$0xff]
    %v117 = vld [vmem:[#allocation2 + $0x2f0] sm:$0xff]
    %v118 = vld [vmem:[#allocation2 + $0x2f8] sm:$0xff]
    %v119 = vld [vmem:[#allocation2 + $0x300] sm:$0xff]
    %v120 = vld [vmem:[#allocation2 + $0x308] sm:$0xff]
    %v121 = vld [vmem:[#allocation2 + $0x310] sm:$0xff]
    %v122 = vld [vmem:[#allocation2 + $0x318] sm:$0xff]
    %v123 = vld [vmem:[#allocation2 + $0x320] sm:$0xff]
    %v124 = vld [vmem:[#allocation2 + $0x328] sm:$0xff]
    %v125 = vld [vmem:[#allocation2 + $0x330] sm:$0xff]
    %v126 = vld [vmem:[#allocation2 + $0x338] sm:$0xff]
    %v127 = vld [vmem:[#allocation2 + $0x340] sm:$0xff]
    %v128 = vld [vmem:[#allocation2 + $0x348] sm:$0xff]
    %v129 = vld [vmem:[#allocation2 + $0x350] sm:$0xff]
    %v130 = vld [vmem:[#allocation2 + $0x358] sm:$0xff]
    %v131 = vld [vmem:[#allocation2 + $0x360] sm:$0xff]
    %v132 = vld [vmem:[#allocation2 + $0x368] sm:$0xff]
    %v133 = vld [vmem:[#allocation2 + $0x370] sm:$0xff]
    %v134 = vld [vmem:[#allocation2 + $0x378] sm:$0xff]
    %v135 = vld [vmem:[#allocation2 + $0x380] sm:$0xff]
    %v136 = vld [vmem:[#allocation2 + $0x388] sm:$0xff]
    %v137 = vld [vmem:[#allocation2 + $0x390] sm:$0xff]
    %v138 = vld [vmem:[#allocation2 + $0x398] sm:$0xff]
    %v139 = vld [vmem:[#allocation2 + $0x3a0] sm:$0xff]
    %v140 = vld [vmem:[#allocation2 + $0x3a8] sm:$0xff]
    %v141 = vld [vmem:[#allocation2 + $0x3b0] sm:$0xff]
    %v142 = vld [vmem:[#allocation2 + $0x3b8] sm:$0xff]
    %v143 = vld [vmem:[#allocation2 + $0x3c0] sm:$0xff]
    %v144 = vld [vmem:[#allocation2 + $0x3c8] sm:$0xff]
    %v145 = vld [vmem:[#allocation2 + $0x3d0] sm:$0xff]
    %v146 = vld [vmem:[#allocation2 + $0x3d8] sm:$0xff]
    %v147 = vld [vmem:[#allocation2 + $0x3e0] sm:$0xff]
    %v148 = vld [vmem:[#allocation2 + $0x3e8] sm:$0xff]
    %v149 = vld [vmem:[#allocation2 + $0x3f0] sm:$0xff]
    %v150 = vld [vmem:[#allocation2 + $0x3f8] sm:$0xff]
    %v151 = vld [vmem:[#allocation2 + $0x400] sm:$0xff]
    %v152 = vld [vmem:[#allocation2 + $0x408] sm:$0xff]
    %v153 = vld [vmem:[#allocation2 + $0x410] sm:$0xff]
    %v154 = vld [vmem:[#allocation2 + $0x418] sm:$0xff]
    %v155 = vld [vmem:[#allocation2 + $0x420] sm:$0xff]
    %v156 = vld [vmem:[#allocation2 + $0x428] sm:$0xff]
    %v157 = vld [vmem:[#allocation2 + $0x430] sm:$0xff]
    %v158 = vld [vmem:[#allocation2 + $0x438] sm:$0xff]
    %v159 = vld [vmem:[#allocation2 + $0x440] sm:$0xff]
    %v160 = vld [vmem:[#allocation2 + $0x448] sm:$0xff]
    %v161 = vld [vmem:[#allocation2 + $0x450] sm:$0xff]
    %v162 = vld [vmem:[#allocation2 + $0x458] sm:$0xff]
    %v163 = vld [vmem:[#allocation2 + $0x460] sm:$0xff]
    %v164 = vld [vmem:[#allocation2 + $0x468] sm:$0xff]
    %v165 = vld [vmem:[#allocation2 + $0x470] sm:$0xff]
    %v166 = vld [vmem:[#allocation2 + $0x478] sm:$0xff]
    %v167 = vld [vmem:[#allocation2 + $0x480] sm:$0xff]
    %v168 = vld [vmem:[#allocation2 + $0x488] sm:$0xff]
    %v169 = vld [vmem:[#allocation2 + $0x490] sm:$0xff]
    %v170 = vld [vmem:[#allocation2 + $0x498] sm:$0xff]
    %v171 = vld [vmem:[#allocation2 + $0x4a0] sm:$0xff]
    %v172 = vld [vmem:[#allocation2 + $0x4a8] sm:$0xff]
    %v173 = vld [vmem:[#allocation2 + $0x4b0] sm:$0xff]
    %v174 = vld [vmem:[#allocation2 + $0x4b8] sm:$0xff]
    %v175 = vld [vmem:[#allocation2 + $0x4c0] sm:$0xff]
    %v176 = vld [vmem:[#allocation2 + $0x4c8] sm:$0xff]
    %v177 = vld [vmem:[#allocation2 + $0x4d0] sm:$0xff]
    %v178 = vld [vmem:[#allocation2 + $0x4d8] sm:$0xff]
    %v179 = vld [vmem:[#allocation2 + $0x4e0] sm:$0xff]
    %v180 = vld [vmem:[#allocation2 + $0x4e8] sm:$0xff]
    %v181 = vld [vmem:[#allocation2 + $0x4f0] sm:$0xff]
    %v182 = vld [vmem:[#allocation2 + $0x4f8] sm:$0xff]
    %v183 = vld [vmem:[#allocation2 + $0x500] sm:$0xff]
    %v184 = vld [vmem:[#allocation2 + $0x508] sm:$0xff]
    %v185 = vld [vmem:[#allocation2 + $0x510] sm:$0xff]
    %v186 = vld [vmem:[#allocation2 + $0x518] sm:$0xff]
    %v187 = vld [vmem:[#allocation2 + $0x520] sm:$0xff]
    %v188 = vld [vmem:[#allocation2 + $0x528] sm:$0xff]
    %v189 = vld [vmem:[#allocation2 + $0x530] sm:$0xff]
    %v190 = vld [vmem:[#allocation2 + $0x538] sm:$0xff]
    %v191 = vld [vmem:[#allocation2 + $0x540] sm:$0xff]
    %v192 = vld [vmem:[#allocation2 + $0x548] sm:$0xff]
    %v193 = vld [vmem:[#allocation2 + $0x550] sm:$0xff]
    %v194 = vld [vmem:[#allocation2 + $0x558] sm:$0xff]
    %v195 = vld [vmem:[#allocation2 + $0x560] sm:$0xff]
    %v196 = vld [vmem:[#allocation2 + $0x568] sm:$0xff]
    %v197 = vld [vmem:[#allocation2 + $0x570] sm:$0xff]
    %v198 = vld [vmem:[#allocation2 + $0x578] sm:$0xff]
    %v199 = vld [vmem:[#allocation2 + $0x580] sm:$0xff]
    %v200 = vld [vmem:[#allocation2 + $0x588] sm:$0xff]
    %v201 = vld [vmem:[#allocation2 + $0x590] sm:$0xff]
    %v202 = vld [vmem:[#allocation2 + $0x598] sm:$0xff]
    %v203 = vld [vmem:[#allocation2 + $0x5a0] sm:$0xff]
    %v204 = vld [vmem:[#allocation2 + $0x5a8] sm:$0xff]
    %v205 = vld [vmem:[#allocation2 + $0x5b0] sm:$0xff]
    %v206 = vld [vmem:[#allocation2 + $0x5b8] sm:$0xff]
    %v207 = vld [vmem:[#allocation2 + $0x5c0] sm:$0xff]
    %v208 = vld [vmem:[#allocation2 + $0x5c8] sm:$0xff]
    %v209 = vld [vmem:[#allocation2 + $0x5d0] sm:$0xff]
    %v210 = vld [vmem:[#allocation2 + $0x5d8] sm:$0xff]
    %v211 = vld [vmem:[#allocation2 + $0x5e0] sm:$0xff]
    %v212 = vld [vmem:[#allocation2 + $0x5e8] sm:$0xff]
    %v213 = vld [vmem:[#allocation2 + $0x5f0] sm:$0xff]
    %v214 = vld [vmem:[#allocation2 + $0x5f8] sm:$0xff]
    %v215 = vld [vmem:[#allocation2 + $0x600] sm:$0xff]
    %v216 = vld [vmem:[#allocation2 + $0x608] sm:$0xff]
    %v217 = vld [vmem:[#allocation2 + $0x610] sm:$0xff]
    %v218 = vld [vmem:[#allocation2 + $0x618] sm:$0xff]
    %v219 = vld [vmem:[#allocation2 + $0x620] sm:$0xff]
    %v220 = vld [vmem:[#allocation2 + $0x628] sm:$0xff]
    %v221 = vld [vmem:[#allocation2 + $0x630] sm:$0xff]
    %v222 = vld [vmem:[#allocation2 + $0x638] sm:$0xff]
    %v223 = vld [vmem:[#allocation2 + $0x640] sm:$0xff]
    %v224 = vld [vmem:[#allocation2 + $0x648] sm:$0xff]
    %v225 = vld [vmem:[#allocation2 + $0x650] sm:$0xff]
    %v226 = vld [vmem:[#allocation2 + $0x658] sm:$0xff]
    %v227 = vld [vmem:[#allocation2 + $0x660] sm:$0xff]
    %v228 = vld [vmem:[#allocation2 + $0x668] sm:$0xff]
    %v229 = vld [vmem:[#allocation2 + $0x670] sm:$0xff]
    %v230 = vld [vmem:[#allocation2 + $0x678] sm:$0xff]
    %v231 = vld [vmem:[#allocation2 + $0x680] sm:$0xff]
    %v232 = vld [vmem:[#allocation2 + $0x688] sm:$0xff]
    %v233 = vld [vmem:[#allocation2 + $0x690] sm:$0xff]
    %v234 = vld [vmem:[#allocation2 + $0x698] sm:$0xff]
    %v235 = vld [vmem:[#allocation2 + $0x6a0] sm:$0xff]
    %v236 = vld [vmem:[#allocation2 + $0x6a8] sm:$0xff]
    %v237 = vld [vmem:[#allocation2 + $0x6b0] sm:$0xff]
    %v238 = vld [vmem:[#allocation2 + $0x6b8] sm:$0xff]
    %v239 = vld [vmem:[#allocation2 + $0x6c0] sm:$0xff]
    %v240 = vld [vmem:[#allocation2 + $0x6c8] sm:$0xff]
    %v241 = vld [vmem:[#allocation2 + $0x6d0] sm:$0xff]
    %v242 = vld [vmem:[#allocation2 + $0x6d8] sm:$0xff]
    %v243 = vld [vmem:[#allocation2 + $0x6e0] sm:$0xff]
    %v244 = vld [vmem:[#allocation2 + $0x6e8] sm:$0xff]
    %v245 = vld [vmem:[#allocation2 + $0x6f0] sm:$0xff]
    %v246 = vld [vmem:[#allocation2 + $0x6f8] sm:$0xff]
    %v247 = vld [vmem:[#allocation2 + $0x700] sm:$0xff]
    %v248 = vld [vmem:[#allocation2 + $0x708] sm:$0xff]
    %v249 = vld [vmem:[#allocation2 + $0x710] sm:$0xff]
    %v250 = vld [vmem:[#allocation2 + $0x718] sm:$0xff]
    %v251 = vld [vmem:[#allocation2 + $0x720] sm:$0xff]
    %v252 = vld [vmem:[#allocation2 + $0x728] sm:$0xff]
    %v253 = vld [vmem:[#allocation2 + $0x730] sm:$0xff]
    %v254 = vld [vmem:[#allocation2 + $0x738] sm:$0xff]
    %v255 = vld [vmem:[#allocation2 + $0x740] sm:$0xff]
    %v256 = vld [vmem:[#allocation2 + $0x748] sm:$0xff]
    %v257 = vld [vmem:[#allocation2 + $0x750] sm:$0xff]
    %v258 = vld [vmem:[#allocation2 + $0x758] sm:$0xff]
    %v259 = vld [vmem:[#allocation2 + $0x760] sm:$0xff]
    %v260 = vld [vmem:[#allocation2 + $0x768] sm:$0xff]
    %v261 = vld [vmem:[#allocation2 + $0x770] sm:$0xff]
    %v262 = vld [vmem:[#allocation2 + $0x778] sm:$0xff]
    %v263 = vld [vmem:[#allocation2 + $0x780] sm:$0xff]
    %v264 = vld [vmem:[#allocation2 + $0x788] sm:$0xff]
    %v265 = vld [vmem:[#allocation2 + $0x790] sm:$0xff]
    %v266 = vld [vmem:[#allocation2 + $0x798] sm:$0xff]
    %v267 = vld [vmem:[#allocation2 + $0x7a0] sm:$0xff]
    %v268 = vld [vmem:[#allocation2 + $0x7a8] sm:$0xff]
    %v269 = vld [vmem:[#allocation2 + $0x7b0] sm:$0xff]
    %v270 = vld [vmem:[#allocation2 + $0x7b8] sm:$0xff]
    %v271 = vld [vmem:[#allocation2 + $0x7c0] sm:$0xff]
    %v272 = vld [vmem:[#allocation2 + $0x7c8] sm:$0xff]
    %v273 = vld [vmem:[#allocation2 + $0x7d0] sm:$0xff]
    %v274 = vld [vmem:[#allocation2 + $0x7d8] sm:$0xff]
    %v275 = vld [vmem:[#allocation2 + $0x7e0] sm:$0xff]
    %v276 = vld [vmem:[#allocation2 + $0x7e8] sm:$0xff]
    %v277 = vld [vmem:[#allocation2 + $0x7f0] sm:$0xff]
    %v278 = vld [vmem:[#allocation2 + $0x7f8] sm:$0xff]
    %v279 = vld [vmem:[#allocation2 + $0x800] sm:$0xff]
    %v280 = vld [vmem:[#allocation2 + $0x808] sm:$0xff]
    %v281 = vld [vmem:[#allocation2 + $0x810] sm:$0xff]
    %v282 = vld [vmem:[#allocation2 + $0x818] sm:$0xff]
    %v283 = vld [vmem:[#allocation2 + $0x820] sm:$0xff]
    %v284 = vld [vmem:[#allocation2 + $0x828] sm:$0xff]
    %v285 = vld [vmem:[#allocation2 + $0x830] sm:$0xff]
    %v286 = vld [vmem:[#allocation2 + $0x838] sm:$0xff]
    %v287 = vld [vmem:[#allocation2 + $0x840] sm:$0xff]
    %v288 = vld [vmem:[#allocation2 + $0x848] sm:$0xff]
    %v289 = vld [vmem:[#allocation2 + $0x850] sm:$0xff]
    %v290 = vld [vmem:[#allocation2 + $0x858] sm:$0xff]
    %v291 = vld [vmem:[#allocation2 + $0x860] sm:$0xff]
    %v292 = vld [vmem:[#allocation2 + $0x868] sm:$0xff]
    %v293 = vld [vmem:[#allocation2 + $0x870] sm:$0xff]
    %v294 = vld [vmem:[#allocation2 + $0x878] sm:$0xff]
    %v295 = vld [vmem:[#allocation2 + $0x880] sm:$0xff]
    %v296 = vld [vmem:[#allocation2 + $0x888] sm:$0xff]
    %v297 = vld [vmem:[#allocation2 + $0x890] sm:$0xff]
    %v298 = vld [vmem:[#allocation2 + $0x898] sm:$0xff]
    %v299 = vld [vmem:[#allocation2 + $0x8a0] sm:$0xff]
    %v300 = vld [vmem:[#allocation2 + $0x8a8] sm:$0xff]
    %v301 = vld [vmem:[#allocation2 + $0x8b0] sm:$0xff]
    %v302 = vld [vmem:[#allocation2 + $0x8b8] sm:$0xff]
    %v303 = vld [vmem:[#allocation2 + $0x8c0] sm:$0xff]
    %v304 = vld [vmem:[#allocation2 + $0x8c8] sm:$0xff]
    %v305 = vld [vmem:[#allocation2 + $0x8d0] sm:$0xff]
    %v306 = vld [vmem:[#allocation2 + $0x8d8] sm:$0xff]
    %v307 = vld [vmem:[#allocation2 + $0x8e0] sm:$0xff]
    %v308 = vld [vmem:[#allocation2 + $0x8e8] sm:$0xff]
    %v309 = vld [vmem:[#allocation2 + $0x8f0] sm:$0xff]
    %v310 = vld [vmem:[#allocation2 + $0x8f8] sm:$0xff]
    %v311 = vld [vmem:[#allocation2 + $0x900] sm:$0xff]
    %v312 = vld [vmem:[#allocation2 + $0x908] sm:$0xff]
    %v313 = vld [vmem:[#allocation2 + $0x910] sm:$0xff]
    %v314 = vld [vmem:[#allocation2 + $0x918] sm:$0xff]
    %v315 = vld [vmem:[#allocation2 + $0x920] sm:$0xff]
    %v316 = vld [vmem:[#allocation2 + $0x928] sm:$0xff]
    %v317 = vld [vmem:[#allocation2 + $0x930] sm:$0xff]
    %v318 = vld [vmem:[#allocation2 + $0x938] sm:$0xff]
    %v319 = vld [vmem:[#allocation2 + $0x940] sm:$0xff]
    %v320 = vld [vmem:[#allocation2 + $0x948] sm:$0xff]
    %v321 = vld [vmem:[#allocation2 + $0x950] sm:$0xff]
    %v322 = vld [vmem:[#allocation2 + $0x958] sm:$0xff]
    %v323 = vld [vmem:[#allocation2 + $0x960] sm:$0xff]
    %v324 = vld [vmem:[#allocation2 + $0x968] sm:$0xff]
    %v325 = vld [vmem:[#allocation2 + $0x970] sm:$0xff]
    %v326 = vld [vmem:[#allocation2 + $0x978] sm:$0xff]
    %v327 = vld [vmem:[#allocation2 + $0x980] sm:$0xff]
    %v328 = vld [vmem:[#allocation2 + $0x988] sm:$0xff]
    %v329 = vld [vmem:[#allocation2 + $0x990] sm:$0xff]
    %v330 = vld [vmem:[#allocation2 + $0x998] sm:$0xff]
    %v331 = vld [vmem:[#allocation2 + $0x9a0] sm:$0xff]
    %v332 = vld [vmem:[#allocation2 + $0x9a8] sm:$0xff]
    %v333 = vld [vmem:[#allocation2 + $0x9b0] sm:$0xff]
    %v334 = vld [vmem:[#allocation2 + $0x9b8] sm:$0xff]
    %v335 = vld [vmem:[#allocation2 + $0x9c0] sm:$0xff]
    %v336 = vld [vmem:[#allocation2 + $0x9c8] sm:$0xff]
    %v337 = vld [vmem:[#allocation2 + $0x9d0] sm:$0xff]
    %v338 = vld [vmem:[#allocation2 + $0x9d8] sm:$0xff]
    %v339 = vld [vmem:[#allocation2 + $0x9e0] sm:$0xff]
    %v340 = vld [vmem:[#allocation2 + $0x9e8] sm:$0xff]
    %v341 = vld [vmem:[#allocation2 + $0x9f0] sm:$0xff]
    %v342 = vld [vmem:[#allocation2 + $0x9f8] sm:$0xff]
    %v343 = vld [vmem:[#allocation2 + $0xa00] sm:$0xff]
    %v344 = vld [vmem:[#allocation2 + $0xa08] sm:$0xff]
    %v345 = vld [vmem:[#allocation2 + $0xa10] sm:$0xff]
    %v346 = vld [vmem:[#allocation2 + $0xa18] sm:$0xff]
    %v347 = vld [vmem:[#allocation2 + $0xa20] sm:$0xff]
    %v348 = vld [vmem:[#allocation2 + $0xa28] sm:$0xff]
    %v349 = vld [vmem:[#allocation2 + $0xa30] sm:$0xff]
    %v350 = vld [vmem:[#allocation2 + $0xa38] sm:$0xff]
    %v351 = vld [vmem:[#allocation2 + $0xa40] sm:$0xff]
    %v352 = vld [vmem:[#allocation2 + $0xa48] sm:$0xff]
    %v353 = vld [vmem:[#allocation2 + $0xa50] sm:$0xff]
    %v354 = vld [vmem:[#allocation2 + $0xa58] sm:$0xff]
    %v355 = vld [vmem:[#allocation2 + $0xa60] sm:$0xff]
    %v356 = vld [vmem:[#allocation2 + $0xa68] sm:$0xff]
    %v357 = vld [vmem:[#allocation2 + $0xa70] sm:$0xff]
    %v358 = vld [vmem:[#allocation2 + $0xa78] sm:$0xff]
    %v359 = vld [vmem:[#allocation2 + $0xa80] sm:$0xff]
    %v360 = vld [vmem:[#allocation2 + $0xa88] sm:$0xff]
    %v361 = vld [vmem:[#allocation2 + $0xa90] sm:$0xff]
    %v362 = vld [vmem:[#allocation2 + $0xa98] sm:$0xff]
    %v363 = vld [vmem:[#allocation2 + $0xaa0] sm:$0xff]
    %v364 = vld [vmem:[#allocation2 + $0xaa8] sm:$0xff]
    %v365 = vld [vmem:[#allocation2 + $0xab0] sm:$0xff]
    %v366 = vld [vmem:[#allocation2 + $0xab8] sm:$0xff]
    %v367 = vld [vmem:[#allocation2 + $0xac0] sm:$0xff]
    %v368 = vld [vmem:[#allocation2 + $0xac8] sm:$0xff]
    %v369 = vld [vmem:[#allocation2 + $0xad0] sm:$0xff]
    %v370 = vld [vmem:[#allocation2 + $0xad8] sm:$0xff]
    %v371 = vld [vmem:[#allocation2 + $0xae0] sm:$0xff]
    %v372 = vld [vmem:[#allocation2 + $0xae8] sm:$0xff]
    %v373 = vld [vmem:[#allocation2 + $0xaf0] sm:$0xff]
    %v374 = vld [vmem:[#allocation2 + $0xaf8] sm:$0xff]
    %v375 = vld [vmem:[#allocation2 + $0xb00] sm:$0xff]
    %v376 = vld [vmem:[#allocation2 + $0xb08] sm:$0xff]
    %v377 = vld [vmem:[#allocation2 + $0xb10] sm:$0xff]
    %v378 = vld [vmem:[#allocation2 + $0xb18] sm:$0xff]
    %v379 = vld [vmem:[#allocation2 + $0xb20] sm:$0xff]
    %v380 = vld [vmem:[#allocation2 + $0xb28] sm:$0xff]
    %v381 = vld [vmem:[#allocation2 + $0xb30] sm:$0xff]
    %v382 = vld [vmem:[#allocation2 + $0xb38] sm:$0xff]
    %v383 = vld [vmem:[#allocation2 + $0xb40] sm:$0xff]
    %v384 = vld [vmem:[#allocation2 + $0xb48] sm:$0xff]
    %v385 = vld [vmem:[#allocation2 + $0xb50] sm:$0xff]
    %v386 = vld [vmem:[#allocation2 + $0xb58] sm:$0xff]
    %v387 = vld [vmem:[#allocation2 + $0xb60] sm:$0xff]
    %v388 = vld [vmem:[#allocation2 + $0xb68] sm:$0xff]
    %v389 = vld [vmem:[#allocation2 + $0xb70] sm:$0xff]
    %v390 = vld [vmem:[#allocation2 + $0xb78] sm:$0xff]
    %v391 = vld [vmem:[#allocation2 + $0xb80] sm:$0xff]
    %v392 = vld [vmem:[#allocation2 + $0xb88] sm:$0xff]
    %v393 = vld [vmem:[#allocation2 + $0xb90] sm:$0xff]
    %v394 = vld [vmem:[#allocation2 + $0xb98] sm:$0xff]
    %v395 = vld [vmem:[#allocation2 + $0xba0] sm:$0xff]
    %v396 = vld [vmem:[#allocation2 + $0xba8] sm:$0xff]
    %v397 = vld [vmem:[#allocation2 + $0xbb0] sm:$0xff]
    %v398 = vld [vmem:[#allocation2 + $0xbb8] sm:$0xff]
    %v399 = vld [vmem:[#allocation2 + $0xbc0] sm:$0xff]
    %v400 = vld [vmem:[#allocation2 + $0xbc8] sm:$0xff]
    %v401 = vld [vmem:[#allocation2 + $0xbd0] sm:$0xff]
    %v402 = vld [vmem:[#allocation2 + $0xbd8] sm:$0xff]
    %v403 = vld [vmem:[#allocation2 + $0xbe0] sm:$0xff]
    %v404 = vld [vmem:[#allocation2 + $0xbe8] sm:$0xff]
    %v405 = vld [vmem:[#allocation2 + $0xbf0] sm:$0xff]
    %v406 = vld [vmem:[#allocation2 + $0xbf8] sm:$0xff]
    %v407 = vld [vmem:[#allocation2 + $0xc00] sm:$0xff]
    %v408 = vld [vmem:[#allocation2 + $0xc08] sm:$0xff]
    %v409 = vld [vmem:[#allocation2 + $0xc10] sm:$0xff]
    %v410 = vld [vmem:[#allocation2 + $0xc18] sm:$0xff]
    %v411 = vld [vmem:[#allocation2 + $0xc20] sm:$0xff]
    %v412 = vld [vmem:[#allocation2 + $0xc28] sm:$0xff]
    %v413 = vld [vmem:[#allocation2 + $0xc30] sm:$0xff]
    %v414 = vld [vmem:[#allocation2 + $0xc38] sm:$0xff]
    %v415 = vld [vmem:[#allocation2 + $0xc40] sm:$0xff]
    %v416 = vld [vmem:[#allocation2 + $0xc48] sm:$0xff]
    %v417 = vld [vmem:[#allocation2 + $0xc50] sm:$0xff]
    %v418 = vld [vmem:[#allocation2 + $0xc58] sm:$0xff]
    %v419 = vld [vmem:[#allocation2 + $0xc60] sm:$0xff]
    %v420 = vld [vmem:[#allocation2 + $0xc68] sm:$0xff]
    %v421 = vld [vmem:[#allocation2 + $0xc70] sm:$0xff]
    %v422 = vld [vmem:[#allocation2 + $0xc78] sm:$0xff]
    %v423 = vld [vmem:[#allocation2 + $0xc80] sm:$0xff]
    %v424 = vld [vmem:[#allocation2 + $0xc88] sm:$0xff]
    %v425 = vld [vmem:[#allocation2 + $0xc90] sm:$0xff]
    %v426 = vld [vmem:[#allocation2 + $0xc98] sm:$0xff]
    %v427 = vld [vmem:[#allocation2 + $0xca0] sm:$0xff]
    %v428 = vld [vmem:[#allocation2 + $0xca8] sm:$0xff]
    %v429 = vld [vmem:[#allocation2 + $0xcb0] sm:$0xff]
    %v430 = vld [vmem:[#allocation2 + $0xcb8] sm:$0xff]
    %v431 = vld [vmem:[#allocation2 + $0xcc0] sm:$0xff]
    %v432 = vld [vmem:[#allocation2 + $0xcc8] sm:$0xff]
    %v433 = vld [vmem:[#allocation2 + $0xcd0] sm:$0xff]
    %v434 = vld [vmem:[#allocation2 + $0xcd8] sm:$0xff]
    %v435 = vld [vmem:[#allocation2 + $0xce0] sm:$0xff]
    %v436 = vld [vmem:[#allocation2 + $0xce8] sm:$0xff]
    %v437 = vld [vmem:[#allocation2 + $0xcf0] sm:$0xff]
    %v438 = vld [vmem:[#allocation2 + $0xcf8] sm:$0xff]
    %v439 = vld [vmem:[#allocation2 + $0xd00] sm:$0xff]
    %v440 = vld [vmem:[#allocation2 + $0xd08] sm:$0xff]
    %v441 = vld [vmem:[#allocation2 + $0xd10] sm:$0xff]
    %v442 = vld [vmem:[#allocation2 + $0xd18] sm:$0xff]
    %v443 = vld [vmem:[#allocation2 + $0xd20] sm:$0xff]
    %v444 = vld [vmem:[#allocation2 + $0xd28] sm:$0xff]
    %v445 = vld [vmem:[#allocation2 + $0xd30] sm:$0xff]
    %v446 = vld [vmem:[#allocation2 + $0xd38] sm:$0xff]
    %v447 = vld [vmem:[#allocation2 + $0xd40] sm:$0xff]
    %v448 = vld [vmem:[#allocation2 + $0xd48] sm:$0xff]
    %v449 = vld [vmem:[#allocation2 + $0xd50] sm:$0xff]
    %v450 = vld [vmem:[#allocation2 + $0xd58] sm:$0xff]
    %v451 = vld [vmem:[#allocation2 + $0xd60] sm:$0xff]
    %v452 = vld [vmem:[#allocation2 + $0xd68] sm:$0xff]
    %v453 = vld [vmem:[#allocation2 + $0xd70] sm:$0xff]
    %v454 = vld [vmem:[#allocation2 + $0xd78] sm:$0xff]
    %v455 = vld [vmem:[#allocation2 + $0xd80] sm:$0xff]
    %v456 = vld [vmem:[#allocation2 + $0xd88] sm:$0xff]
    %v457 = vld [vmem:[#allocation2 + $0xd90] sm:$0xff]
    %v458 = vld [vmem:[#allocation2 + $0xd98] sm:$0xff]
    %v459 = vld [vmem:[#allocation2 + $0xda0] sm:$0xff]
    %v460 = vld [vmem:[#allocation2 + $0xda8] sm:$0xff]
    %v461 = vld [vmem:[#allocation2 + $0xdb0] sm:$0xff]
    %v462 = vld [vmem:[#allocation2 + $0xdb8] sm:$0xff]
    %v463 = vld [vmem:[#allocation2 + $0xdc0] sm:$0xff]
    %v464 = vld [vmem:[#allocation2 + $0xdc8] sm:$0xff]
    %v465 = vld [vmem:[#allocation2 + $0xdd0] sm:$0xff]
    %v466 = vld [vmem:[#allocation2 + $0xdd8] sm:$0xff]
    %v467 = vld [vmem:[#allocation2 + $0xde0] sm:$0xff]
    %v468 = vld [vmem:[#allocation2 + $0xde8] sm:$0xff]
    %v469 = vld [vmem:[#allocation2 + $0xdf0] sm:$0xff]
    %v470 = vld [vmem:[#allocation2 + $0xdf8] sm:$0xff]
    %v471 = vld [vmem:[#allocation2 + $0xe00] sm:$0xff]
    %v472 = vld [vmem:[#allocation2 + $0xe08] sm:$0xff]
    %v473 = vld [vmem:[#allocation2 + $0xe10] sm:$0xff]
    %v474 = vld [vmem:[#allocation2 + $0xe18] sm:$0xff]
    %v475 = vld [vmem:[#allocation2 + $0xe20] sm:$0xff]
    %v476 = vld [vmem:[#allocation2 + $0xe28] sm:$0xff]
    %v477 = vld [vmem:[#allocation2 + $0xe30] sm:$0xff]
    %v478 = vld [vmem:[#allocation2 + $0xe38] sm:$0xff]
    %v479 = vld [vmem:[#allocation2 + $0xe40] sm:$0xff]
    %v480 = vld [vmem:[#allocation2 + $0xe48] sm:$0xff]
    %v481 = vld [vmem:[#allocation2 + $0xe50] sm:$0xff]
    %v482 = vld [vmem:[#allocation2 + $0xe58] sm:$0xff]
    %v483 = vld [vmem:[#allocation2 + $0xe60] sm:$0xff]
    %v484 = vld [vmem:[#allocation2 + $0xe68] sm:$0xff]
    %v485 = vld [vmem:[#allocation2 + $0xe70] sm:$0xff]
    %v486 = vld [vmem:[#allocation2 + $0xe78] sm:$0xff]
    %v487 = vld [vmem:[#allocation2 + $0xe80] sm:$0xff]
    %v488 = vld [vmem:[#allocation2 + $0xe88] sm:$0xff]
    %v489 = vld [vmem:[#allocation2 + $0xe90] sm:$0xff]
    %v490 = vld [vmem:[#allocation2 + $0xe98] sm:$0xff]
    %v491 = vld [vmem:[#allocation2 + $0xea0] sm:$0xff]
    %v492 = vld [vmem:[#allocation2 + $0xea8] sm:$0xff]
    %v493 = vld [vmem:[#allocation2 + $0xeb0] sm:$0xff]
    %v494 = vld [vmem:[#allocation2 + $0xeb8] sm:$0xff]
    %v495 = vld [vmem:[#allocation2 + $0xec0] sm:$0xff]
    %v496 = vld [vmem:[#allocation2 + $0xec8] sm:$0xff]
    %v497 = vld [vmem:[#allocation2 + $0xed0] sm:$0xff]
    %v498 = vld [vmem:[#allocation2 + $0xed8] sm:$0xff]
    %v499 = vld [vmem:[#allocation2 + $0xee0] sm:$0xff]
    %v500 = vld [vmem:[#allocation2 + $0xee8] sm:$0xff]
    %v501 = vld [vmem:[#allocation2 + $0xef0] sm:$0xff]
    %v502 = vld [vmem:[#allocation2 + $0xef8] sm:$0xff]
    %v503 = vld [vmem:[#allocation2 + $0xf00] sm:$0xff]
    %v504 = vld [vmem:[#allocation2 + $0xf08] sm:$0xff]
    %v505 = vld [vmem:[#allocation2 + $0xf10] sm:$0xff]
    %v506 = vld [vmem:[#allocation2 + $0xf18] sm:$0xff]
    %v507 = vld [vmem:[#allocation2 + $0xf20] sm:$0xff]
    %v508 = vld [vmem:[#allocation2 + $0xf28] sm:$0xff]
    %v509 = vld [vmem:[#allocation2 + $0xf30] sm:$0xff]
    %v510 = vld [vmem:[#allocation2 + $0xf38] sm:$0xff]
    %v511 = vld [vmem:[#allocation2 + $0xf40] sm:$0xff]
    %v512 = vld [vmem:[#allocation2 + $0xf48] sm:$0xff]
    %v513 = vld [vmem:[#allocation2 + $0xf50] sm:$0xff]
    %v514 = vld [vmem:[#allocation2 + $0xf58] sm:$0xff]
    %v515 = vld [vmem:[#allocation2 + $0xf60] sm:$0xff]
    %v516 = vld [vmem:[#allocation2 + $0xf68] sm:$0xff]
    %v517 = vld [vmem:[#allocation2 + $0xf70] sm:$0xff]
    %v518 = vld [vmem:[#allocation2 + $0xf78] sm:$0xff]
    %v519 = vld [vmem:[#allocation2 + $0xf80] sm:$0xff]
    %v520 = vld [vmem:[#allocation2 + $0xf88] sm:$0xff]
    %v521 = vld [vmem:[#allocation2 + $0xf90] sm:$0xff]
    %v522 = vld [vmem:[#allocation2 + $0xf98] sm:$0xff]
    %v523 = vld [vmem:[#allocation2 + $0xfa0] sm:$0xff]
    %v524 = vld [vmem:[#allocation2 + $0xfa8] sm:$0xff]
    %v525 = vld [vmem:[#allocation2 + $0xfb0] sm:$0xff]
    %v526 = vld [vmem:[#allocation2 + $0xfb8] sm:$0xff]
    %v527 = vld [vmem:[#allocation2 + $0xfc0] sm:$0xff]
    %v528 = vld [vmem:[#allocation2 + $0xfc8] sm:$0xff]
    %v529 = vld [vmem:[#allocation2 + $0xfd0] sm:$0xff]
    %v530 = vld [vmem:[#allocation2 + $0xfd8] sm:$0xff]
    %v531 = vld [vmem:[#allocation2 + $0xfe0] sm:$0xff]
    %v532 = vld [vmem:[#allocation2 + $0xfe8] sm:$0xff]
    %v533 = vld [vmem:[#allocation2 + $0xff0] sm:$0xff]
    %v534 = vld [vmem:[#allocation2 + $0xff8] sm:$0xff]
    %535 = vst [vmem:[#allocation5] sm:$0xff] %v23
    %536 = vst [vmem:[#allocation5 + $0x8] sm:$0xff] %v24
    %537 = vst [vmem:[#allocation5 + $0x10] sm:$0xff] %v25
    %538 = vst [vmem:[#allocation5 + $0x18] sm:$0xff] %v26
    %539 = vst [vmem:[#allocation5 + $0x20] sm:$0xff] %v27
    %540 = vst [vmem:[#allocation5 + $0x28] sm:$0xff] %v28
    %541 = vst [vmem:[#allocation5 + $0x30] sm:$0xff] %v29
    %542 = vst [vmem:[#allocation5 + $0x38] sm:$0xff] %v30
    %543 = vst [vmem:[#allocation5 + $0x40] sm:$0xff] %v31
    %544 = vst [vmem:[#allocation5 + $0x48] sm:$0xff] %v32
    %545 = vst [vmem:[#allocation5 + $0x50] sm:$0xff] %v33
    %546 = vst [vmem:[#allocation5 + $0x58] sm:$0xff] %v34
    %547 = vst [vmem:[#allocation5 + $0x60] sm:$0xff] %v35
    %548 = vst [vmem:[#allocation5 + $0x68] sm:$0xff] %v36
    %549 = vst [vmem:[#allocation5 + $0x70] sm:$0xff] %v37
    %550 = vst [vmem:[#allocation5 + $0x78] sm:$0xff] %v38
    %551 = vst [vmem:[#allocation5 + $0x80] sm:$0xff] %v39
    %552 = vst [vmem:[#allocation5 + $0x88] sm:$0xff] %v40
    %553 = vst [vmem:[#allocation5 + $0x90] sm:$0xff] %v41
    %554 = vst [vmem:[#allocation5 + $0x98] sm:$0xff] %v42
    %555 = vst [vmem:[#allocation5 + $0xa0] sm:$0xff] %v43
    %556 = vst [vmem:[#allocation5 + $0xa8] sm:$0xff] %v44
    %557 = vst [vmem:[#allocation5 + $0xb0] sm:$0xff] %v45
    %558 = vst [vmem:[#allocation5 + $0xb8] sm:$0xff] %v46
    %559 = vst [vmem:[#allocation5 + $0xc0] sm:$0xff] %v47
    %560 = vst [vmem:[#allocation5 + $0xc8] sm:$0xff] %v48
    %561 = vst [vmem:[#allocation5 + $0xd0] sm:$0xff] %v49
    %562 = vst [vmem:[#allocation5 + $0xd8] sm:$0xff] %v50
    %563 = vst [vmem:[#allocation5 + $0xe0] sm:$0xff] %v51
    %564 = vst [vmem:[#allocation5 + $0xe8] sm:$0xff] %v52
    %565 = vst [vmem:[#allocation5 + $0xf0] sm:$0xff] %v53
    %566 = vst [vmem:[#allocation5 + $0xf8] sm:$0xff] %v54
    %567 = vst [vmem:[#allocation5 + $0x100] sm:$0xff] %v55
    %568 = vst [vmem:[#allocation5 + $0x108] sm:$0xff] %v56
    %569 = vst [vmem:[#allocation5 + $0x110] sm:$0xff] %v57
    %570 = vst [vmem:[#allocation5 + $0x118] sm:$0xff] %v58
    %571 = vst [vmem:[#allocation5 + $0x120] sm:$0xff] %v59
    %572 = vst [vmem:[#allocation5 + $0x128] sm:$0xff] %v60
    %573 = vst [vmem:[#allocation5 + $0x130] sm:$0xff] %v61
    %574 = vst [vmem:[#allocation5 + $0x138] sm:$0xff] %v62
    %575 = vst [vmem:[#allocation5 + $0x140] sm:$0xff] %v63
    %576 = vst [vmem:[#allocation5 + $0x148] sm:$0xff] %v64
    %577 = vst [vmem:[#allocation5 + $0x150] sm:$0xff] %v65
    %578 = vst [vmem:[#allocation5 + $0x158] sm:$0xff] %v66
    %579 = vst [vmem:[#allocation5 + $0x160] sm:$0xff] %v67
    %580 = vst [vmem:[#allocation5 + $0x168] sm:$0xff] %v68
    %581 = vst [vmem:[#allocation5 + $0x170] sm:$0xff] %v69
    %582 = vst [vmem:[#allocation5 + $0x178] sm:$0xff] %v70
    %583 = vst [vmem:[#allocation5 + $0x180] sm:$0xff] %v71
    %584 = vst [vmem:[#allocation5 + $0x188] sm:$0xff] %v72
    %585 = vst [vmem:[#allocation5 + $0x190] sm:$0xff] %v73
    %586 = vst [vmem:[#allocation5 + $0x198] sm:$0xff] %v74
    %587 = vst [vmem:[#allocation5 + $0x1a0] sm:$0xff] %v75
    %588 = vst [vmem:[#allocation5 + $0x1a8] sm:$0xff] %v76
    %589 = vst [vmem:[#allocation5 + $0x1b0] sm:$0xff] %v77
    %590 = vst [vmem:[#allocation5 + $0x1b8] sm:$0xff] %v78
    %591 = vst [vmem:[#allocation5 + $0x1c0] sm:$0xff] %v79
    %592 = vst [vmem:[#allocation5 + $0x1c8] sm:$0xff] %v80
    %593 = vst [vmem:[#allocation5 + $0x1d0] sm:$0xff] %v81
    %594 = vst [vmem:[#allocation5 + $0x1d8] sm:$0xff] %v82
    %595 = vst [vmem:[#allocation5 + $0x1e0] sm:$0xff] %v83
    %596 = vst [vmem:[#allocation5 + $0x1e8] sm:$0xff] %v84
    %597 = vst [vmem:[#allocation5 + $0x1f0] sm:$0xff] %v85
    %598 = vst [vmem:[#allocation5 + $0x1f8] sm:$0xff] %v86
    %599 = vst [vmem:[#allocation5 + $0x200] sm:$0xff] %v87
    %600 = vst [vmem:[#allocation5 + $0x208] sm:$0xff] %v88
    %601 = vst [vmem:[#allocation5 + $0x210] sm:$0xff] %v89
    %602 = vst [vmem:[#allocation5 + $0x218] sm:$0xff] %v90
    %603 = vst [vmem:[#allocation5 + $0x220] sm:$0xff] %v91
    %604 = vst [vmem:[#allocation5 + $0x228] sm:$0xff] %v92
    %605 = vst [vmem:[#allocation5 + $0x230] sm:$0xff] %v93
    %606 = vst [vmem:[#allocation5 + $0x238] sm:$0xff] %v94
    %607 = vst [vmem:[#allocation5 + $0x240] sm:$0xff] %v95
    %608 = vst [vmem:[#allocation5 + $0x248] sm:$0xff] %v96
    %609 = vst [vmem:[#allocation5 + $0x250] sm:$0xff] %v97
    %610 = vst [vmem:[#allocation5 + $0x258] sm:$0xff] %v98
    %611 = vst [vmem:[#allocation5 + $0x260] sm:$0xff] %v99
    %612 = vst [vmem:[#allocation5 + $0x268] sm:$0xff] %v100
    %613 = vst [vmem:[#allocation5 + $0x270] sm:$0xff] %v101
    %614 = vst [vmem:[#allocation5 + $0x278] sm:$0xff] %v102
    %615 = vst [vmem:[#allocation5 + $0x280] sm:$0xff] %v103
    %616 = vst [vmem:[#allocation5 + $0x288] sm:$0xff] %v104
    %617 = vst [vmem:[#allocation5 + $0x290] sm:$0xff] %v105
    %618 = vst [vmem:[#allocation5 + $0x298] sm:$0xff] %v106
    %619 = vst [vmem:[#allocation5 + $0x2a0] sm:$0xff] %v107
    %620 = vst [vmem:[#allocation5 + $0x2a8] sm:$0xff] %v108
    %621 = vst [vmem:[#allocation5 + $0x2b0] sm:$0xff] %v109
    %622 = vst [vmem:[#allocation5 + $0x2b8] sm:$0xff] %v110
    %623 = vst [vmem:[#allocation5 + $0x2c0] sm:$0xff] %v111
    %624 = vst [vmem:[#allocation5 + $0x2c8] sm:$0xff] %v112
    %625 = vst [vmem:[#allocation5 + $0x2d0] sm:$0xff] %v113
    %626 = vst [vmem:[#allocation5 + $0x2d8] sm:$0xff] %v114
    %627 = vst [vmem:[#allocation5 + $0x2e0] sm:$0xff] %v115
    %628 = vst [vmem:[#allocation5 + $0x2e8] sm:$0xff] %v116
    %629 = vst [vmem:[#allocation5 + $0x2f0] sm:$0xff] %v117
    %630 = vst [vmem:[#allocation5 + $0x2f8] sm:$0xff] %v118
    %631 = vst [vmem:[#allocation5 + $0x300] sm:$0xff] %v119
    %632 = vst [vmem:[#allocation5 + $0x308] sm:$0xff] %v120
    %633 = vst [vmem:[#allocation5 + $0x310] sm:$0xff] %v121
    %634 = vst [vmem:[#allocation5 + $0x318] sm:$0xff] %v122
    %635 = vst [vmem:[#allocation5 + $0x320] sm:$0xff] %v123
    %636 = vst [vmem:[#allocation5 + $0x328] sm:$0xff] %v124
    %637 = vst [vmem:[#allocation5 + $0x330] sm:$0xff] %v125
    %638 = vst [vmem:[#allocation5 + $0x338] sm:$0xff] %v126
    %639 = vst [vmem:[#allocation5 + $0x340] sm:$0xff] %v127
    %640 = vst [vmem:[#allocation5 + $0x348] sm:$0xff] %v128
    %641 = vst [vmem:[#allocation5 + $0x350] sm:$0xff] %v129
    %642 = vst [vmem:[#allocation5 + $0x358] sm:$0xff] %v130
    %643 = vst [vmem:[#allocation5 + $0x360] sm:$0xff] %v131
    %644 = vst [vmem:[#allocation5 + $0x368] sm:$0xff] %v132
    %645 = vst [vmem:[#allocation5 + $0x370] sm:$0xff] %v133
    %646 = vst [vmem:[#allocation5 + $0x378] sm:$0xff] %v134
    %647 = vst [vmem:[#allocation5 + $0x380] sm:$0xff] %v135
    %648 = vst [vmem:[#allocation5 + $0x388] sm:$0xff] %v136
    %649 = vst [vmem:[#allocation5 + $0x390] sm:$0xff] %v137
    %650 = vst [vmem:[#allocation5 + $0x398] sm:$0xff] %v138
    %651 = vst [vmem:[#allocation5 + $0x3a0] sm:$0xff] %v139
    %652 = vst [vmem:[#allocation5 + $0x3a8] sm:$0xff] %v140
    %653 = vst [vmem:[#allocation5 + $0x3b0] sm:$0xff] %v141
    %654 = vst [vmem:[#allocation5 + $0x3b8] sm:$0xff] %v142
    %655 = vst [vmem:[#allocation5 + $0x3c0] sm:$0xff] %v143
    %656 = vst [vmem:[#allocation5 + $0x3c8] sm:$0xff] %v144
    %657 = vst [vmem:[#allocation5 + $0x3d0] sm:$0xff] %v145
    %658 = vst [vmem:[#allocation5 + $0x3d8] sm:$0xff] %v146
    %659 = vst [vmem:[#allocation5 + $0x3e0] sm:$0xff] %v147
    %660 = vst [vmem:[#allocation5 + $0x3e8] sm:$0xff] %v148
    %661 = vst [vmem:[#allocation5 + $0x3f0] sm:$0xff] %v149
    %662 = vst [vmem:[#allocation5 + $0x3f8] sm:$0xff] %v150
    %663 = vst [vmem:[#allocation5 + $0x400] sm:$0xff] %v151
    %664 = vst [vmem:[#allocation5 + $0x408] sm:$0xff] %v152
    %665 = vst [vmem:[#allocation5 + $0x410] sm:$0xff] %v153
    %666 = vst [vmem:[#allocation5 + $0x418] sm:$0xff] %v154
    %667 = vst [vmem:[#allocation5 + $0x420] sm:$0xff] %v155
    %668 = vst [vmem:[#allocation5 + $0x428] sm:$0xff] %v156
    %669 = vst [vmem:[#allocation5 + $0x430] sm:$0xff] %v157
    %670 = vst [vmem:[#allocation5 + $0x438] sm:$0xff] %v158
    %671 = vst [vmem:[#allocation5 + $0x440] sm:$0xff] %v159
    %672 = vst [vmem:[#allocation5 + $0x448] sm:$0xff] %v160
    %673 = vst [vmem:[#allocation5 + $0x450] sm:$0xff] %v161
    %674 = vst [vmem:[#allocation5 + $0x458] sm:$0xff] %v162
    %675 = vst [vmem:[#allocation5 + $0x460] sm:$0xff] %v163
    %676 = vst [vmem:[#allocation5 + $0x468] sm:$0xff] %v164
    %677 = vst [vmem:[#allocation5 + $0x470] sm:$0xff] %v165
    %678 = vst [vmem:[#allocation5 + $0x478] sm:$0xff] %v166
    %679 = vst [vmem:[#allocation5 + $0x480] sm:$0xff] %v167
    %680 = vst [vmem:[#allocation5 + $0x488] sm:$0xff] %v168
    %681 = vst [vmem:[#allocation5 + $0x490] sm:$0xff] %v169
    %682 = vst [vmem:[#allocation5 + $0x498] sm:$0xff] %v170
    %683 = vst [vmem:[#allocation5 + $0x4a0] sm:$0xff] %v171
    %684 = vst [vmem:[#allocation5 + $0x4a8] sm:$0xff] %v172
    %685 = vst [vmem:[#allocation5 + $0x4b0] sm:$0xff] %v173
    %686 = vst [vmem:[#allocation5 + $0x4b8] sm:$0xff] %v174
    %687 = vst [vmem:[#allocation5 + $0x4c0] sm:$0xff] %v175
    %688 = vst [vmem:[#allocation5 + $0x4c8] sm:$0xff] %v176
    %689 = vst [vmem:[#allocation5 + $0x4d0] sm:$0xff] %v177
    %690 = vst [vmem:[#allocation5 + $0x4d8] sm:$0xff] %v178
    %691 = vst [vmem:[#allocation5 + $0x4e0] sm:$0xff] %v179
    %692 = vst [vmem:[#allocation5 + $0x4e8] sm:$0xff] %v180
    %693 = vst [vmem:[#allocation5 + $0x4f0] sm:$0xff] %v181
    %694 = vst [vmem:[#allocation5 + $0x4f8] sm:$0xff] %v182
    %695 = vst [vmem:[#allocation5 + $0x500] sm:$0xff] %v183
    %696 = vst [vmem:[#allocation5 + $0x508] sm:$0xff] %v184
    %697 = vst [vmem:[#allocation5 + $0x510] sm:$0xff] %v185
    %698 = vst [vmem:[#allocation5 + $0x518] sm:$0xff] %v186
    %699 = vst [vmem:[#allocation5 + $0x520] sm:$0xff] %v187
    %700 = vst [vmem:[#allocation5 + $0x528] sm:$0xff] %v188
    %701 = vst [vmem:[#allocation5 + $0x530] sm:$0xff] %v189
    %702 = vst [vmem:[#allocation5 + $0x538] sm:$0xff] %v190
    %703 = vst [vmem:[#allocation5 + $0x540] sm:$0xff] %v191
    %704 = vst [vmem:[#allocation5 + $0x548] sm:$0xff] %v192
    %705 = vst [vmem:[#allocation5 + $0x550] sm:$0xff] %v193
    %706 = vst [vmem:[#allocation5 + $0x558] sm:$0xff] %v194
    %707 = vst [vmem:[#allocation5 + $0x560] sm:$0xff] %v195
    %708 = vst [vmem:[#allocation5 + $0x568] sm:$0xff] %v196
    %709 = vst [vmem:[#allocation5 + $0x570] sm:$0xff] %v197
    %710 = vst [vmem:[#allocation5 + $0x578] sm:$0xff] %v198
    %711 = vst [vmem:[#allocation5 + $0x580] sm:$0xff] %v199
    %712 = vst [vmem:[#allocation5 + $0x588] sm:$0xff] %v200
    %713 = vst [vmem:[#allocation5 + $0x590] sm:$0xff] %v201
    %714 = vst [vmem:[#allocation5 + $0x598] sm:$0xff] %v202
    %715 = vst [vmem:[#allocation5 + $0x5a0] sm:$0xff] %v203
    %716 = vst [vmem:[#allocation5 + $0x5a8] sm:$0xff] %v204
    %717 = vst [vmem:[#allocation5 + $0x5b0] sm:$0xff] %v205
    %718 = vst [vmem:[#allocation5 + $0x5b8] sm:$0xff] %v206
    %719 = vst [vmem:[#allocation5 + $0x5c0] sm:$0xff] %v207
    %720 = vst [vmem:[#allocation5 + $0x5c8] sm:$0xff] %v208
    %721 = vst [vmem:[#allocation5 + $0x5d0] sm:$0xff] %v209
    %722 = vst [vmem:[#allocation5 + $0x5d8] sm:$0xff] %v210
    %723 = vst [vmem:[#allocation5 + $0x5e0] sm:$0xff] %v211
    %724 = vst [vmem:[#allocation5 + $0x5e8] sm:$0xff] %v212
    %725 = vst [vmem:[#allocation5 + $0x5f0] sm:$0xff] %v213
    %726 = vst [vmem:[#allocation5 + $0x5f8] sm:$0xff] %v214
    %727 = vst [vmem:[#allocation5 + $0x600] sm:$0xff] %v215
    %728 = vst [vmem:[#allocation5 + $0x608] sm:$0xff] %v216
    %729 = vst [vmem:[#allocation5 + $0x610] sm:$0xff] %v217
    %730 = vst [vmem:[#allocation5 + $0x618] sm:$0xff] %v218
    %731 = vst [vmem:[#allocation5 + $0x620] sm:$0xff] %v219
    %732 = vst [vmem:[#allocation5 + $0x628] sm:$0xff] %v220
    %733 = vst [vmem:[#allocation5 + $0x630] sm:$0xff] %v221
    %734 = vst [vmem:[#allocation5 + $0x638] sm:$0xff] %v222
    %735 = vst [vmem:[#allocation5 + $0x640] sm:$0xff] %v223
    %736 = vst [vmem:[#allocation5 + $0x648] sm:$0xff] %v224
    %737 = vst [vmem:[#allocation5 + $0x650] sm:$0xff] %v225
    %738 = vst [vmem:[#allocation5 + $0x658] sm:$0xff] %v226
    %739 = vst [vmem:[#allocation5 + $0x660] sm:$0xff] %v227
    %740 = vst [vmem:[#allocation5 + $0x668] sm:$0xff] %v228
    %741 = vst [vmem:[#allocation5 + $0x670] sm:$0xff] %v229
    %742 = vst [vmem:[#allocation5 + $0x678] sm:$0xff] %v230
    %743 = vst [vmem:[#allocation5 + $0x680] sm:$0xff] %v231
    %744 = vst [vmem:[#allocation5 + $0x688] sm:$0xff] %v232
    %745 = vst [vmem:[#allocation5 + $0x690] sm:$0xff] %v233
    %746 = vst [vmem:[#allocation5 + $0x698] sm:$0xff] %v234
    %747 = vst [vmem:[#allocation5 + $0x6a0] sm:$0xff] %v235
    %748 = vst [vmem:[#allocation5 + $0x6a8] sm:$0xff] %v236
    %749 = vst [vmem:[#allocation5 + $0x6b0] sm:$0xff] %v237
    %750 = vst [vmem:[#allocation5 + $0x6b8] sm:$0xff] %v238
    %751 = vst [vmem:[#allocation5 + $0x6c0] sm:$0xff] %v239
    %752 = vst [vmem:[#allocation5 + $0x6c8] sm:$0xff] %v240
    %753 = vst [vmem:[#allocation5 + $0x6d0] sm:$0xff] %v241
    %754 = vst [vmem:[#allocation5 + $0x6d8] sm:$0xff] %v242
    %755 = vst [vmem:[#allocation5 + $0x6e0] sm:$0xff] %v243
    %756 = vst [vmem:[#allocation5 + $0x6e8] sm:$0xff] %v244
    %757 = vst [vmem:[#allocation5 + $0x6f0] sm:$0xff] %v245
    %758 = vst [vmem:[#allocation5 + $0x6f8] sm:$0xff] %v246
    %759 = vst [vmem:[#allocation5 + $0x700] sm:$0xff] %v247
    %760 = vst [vmem:[#allocation5 + $0x708] sm:$0xff] %v248
    %761 = vst [vmem:[#allocation5 + $0x710] sm:$0xff] %v249
    %762 = vst [vmem:[#allocation5 + $0x718] sm:$0xff] %v250
    %763 = vst [vmem:[#allocation5 + $0x720] sm:$0xff] %v251
    %764 = vst [vmem:[#allocation5 + $0x728] sm:$0xff] %v252
    %765 = vst [vmem:[#allocation5 + $0x730] sm:$0xff] %v253
    %766 = vst [vmem:[#allocation5 + $0x738] sm:$0xff] %v254
    %767 = vst [vmem:[#allocation5 + $0x740] sm:$0xff] %v255
    %768 = vst [vmem:[#allocation5 + $0x748] sm:$0xff] %v256
    %769 = vst [vmem:[#allocation5 + $0x750] sm:$0xff] %v257
    %770 = vst [vmem:[#allocation5 + $0x758] sm:$0xff] %v258
    %771 = vst [vmem:[#allocation5 + $0x760] sm:$0xff] %v259
    %772 = vst [vmem:[#allocation5 + $0x768] sm:$0xff] %v260
    %773 = vst [vmem:[#allocation5 + $0x770] sm:$0xff] %v261
    %774 = vst [vmem:[#allocation5 + $0x778] sm:$0xff] %v262
    %775 = vst [vmem:[#allocation5 + $0x780] sm:$0xff] %v263
    %776 = vst [vmem:[#allocation5 + $0x788] sm:$0xff] %v264
    %777 = vst [vmem:[#allocation5 + $0x790] sm:$0xff] %v265
    %778 = vst [vmem:[#allocation5 + $0x798] sm:$0xff] %v266
    %779 = vst [vmem:[#allocation5 + $0x7a0] sm:$0xff] %v267
    %780 = vst [vmem:[#allocation5 + $0x7a8] sm:$0xff] %v268
    %781 = vst [vmem:[#allocation5 + $0x7b0] sm:$0xff] %v269
    %782 = vst [vmem:[#allocation5 + $0x7b8] sm:$0xff] %v270
    %783 = vst [vmem:[#allocation5 + $0x7c0] sm:$0xff] %v271
    %784 = vst [vmem:[#allocation5 + $0x7c8] sm:$0xff] %v272
    %785 = vst [vmem:[#allocation5 + $0x7d0] sm:$0xff] %v273
    %786 = vst [vmem:[#allocation5 + $0x7d8] sm:$0xff] %v274
    %787 = vst [vmem:[#allocation5 + $0x7e0] sm:$0xff] %v275
    %788 = vst [vmem:[#allocation5 + $0x7e8] sm:$0xff] %v276
    %789 = vst [vmem:[#allocation5 + $0x7f0] sm:$0xff] %v277
    %790 = vst [vmem:[#allocation5 + $0x7f8] sm:$0xff] %v278
    %791 = vst [vmem:[#allocation5 + $0x800] sm:$0xff] %v279
    %792 = vst [vmem:[#allocation5 + $0x808] sm:$0xff] %v280
    %793 = vst [vmem:[#allocation5 + $0x810] sm:$0xff] %v281
    %794 = vst [vmem:[#allocation5 + $0x818] sm:$0xff] %v282
    %795 = vst [vmem:[#allocation5 + $0x820] sm:$0xff] %v283
    %796 = vst [vmem:[#allocation5 + $0x828] sm:$0xff] %v284
    %797 = vst [vmem:[#allocation5 + $0x830] sm:$0xff] %v285
    %798 = vst [vmem:[#allocation5 + $0x838] sm:$0xff] %v286
    %799 = vst [vmem:[#allocation5 + $0x840] sm:$0xff] %v287
    %800 = vst [vmem:[#allocation5 + $0x848] sm:$0xff] %v288
    %801 = vst [vmem:[#allocation5 + $0x850] sm:$0xff] %v289
    %802 = vst [vmem:[#allocation5 + $0x858] sm:$0xff] %v290
    %803 = vst [vmem:[#allocation5 + $0x860] sm:$0xff] %v291
    %804 = vst [vmem:[#allocation5 + $0x868] sm:$0xff] %v292
    %805 = vst [vmem:[#allocation5 + $0x870] sm:$0xff] %v293
    %806 = vst [vmem:[#allocation5 + $0x878] sm:$0xff] %v294
    %807 = vst [vmem:[#allocation5 + $0x880] sm:$0xff] %v295
    %808 = vst [vmem:[#allocation5 + $0x888] sm:$0xff] %v296
    %809 = vst [vmem:[#allocation5 + $0x890] sm:$0xff] %v297
    %810 = vst [vmem:[#allocation5 + $0x898] sm:$0xff] %v298
    %811 = vst [vmem:[#allocation5 + $0x8a0] sm:$0xff] %v299
    %812 = vst [vmem:[#allocation5 + $0x8a8] sm:$0xff] %v300
    %813 = vst [vmem:[#allocation5 + $0x8b0] sm:$0xff] %v301
    %814 = vst [vmem:[#allocation5 + $0x8b8] sm:$0xff] %v302
    %815 = vst [vmem:[#allocation5 + $0x8c0] sm:$0xff] %v303
    %816 = vst [vmem:[#allocation5 + $0x8c8] sm:$0xff] %v304
    %817 = vst [vmem:[#allocation5 + $0x8d0] sm:$0xff] %v305
    %818 = vst [vmem:[#allocation5 + $0x8d8] sm:$0xff] %v306
    %819 = vst [vmem:[#allocation5 + $0x8e0] sm:$0xff] %v307
    %820 = vst [vmem:[#allocation5 + $0x8e8] sm:$0xff] %v308
    %821 = vst [vmem:[#allocation5 + $0x8f0] sm:$0xff] %v309
    %822 = vst [vmem:[#allocation5 + $0x8f8] sm:$0xff] %v310
    %823 = vst [vmem:[#allocation5 + $0x900] sm:$0xff] %v311
    %824 = vst [vmem:[#allocation5 + $0x908] sm:$0xff] %v312
    %825 = vst [vmem:[#allocation5 + $0x910] sm:$0xff] %v313
    %826 = vst [vmem:[#allocation5 + $0x918] sm:$0xff] %v314
    %827 = vst [vmem:[#allocation5 + $0x920] sm:$0xff] %v315
    %828 = vst [vmem:[#allocation5 + $0x928] sm:$0xff] %v316
    %829 = vst [vmem:[#allocation5 + $0x930] sm:$0xff] %v317
    %830 = vst [vmem:[#allocation5 + $0x938] sm:$0xff] %v318
    %831 = vst [vmem:[#allocation5 + $0x940] sm:$0xff] %v319
    %832 = vst [vmem:[#allocation5 + $0x948] sm:$0xff] %v320
    %833 = vst [vmem:[#allocation5 + $0x950] sm:$0xff] %v321
    %834 = vst [vmem:[#allocation5 + $0x958] sm:$0xff] %v322
    %835 = vst [vmem:[#allocation5 + $0x960] sm:$0xff] %v323
    %836 = vst [vmem:[#allocation5 + $0x968] sm:$0xff] %v324
    %837 = vst [vmem:[#allocation5 + $0x970] sm:$0xff] %v325
    %838 = vst [vmem:[#allocation5 + $0x978] sm:$0xff] %v326
    %839 = vst [vmem:[#allocation5 + $0x980] sm:$0xff] %v327
    %840 = vst [vmem:[#allocation5 + $0x988] sm:$0xff] %v328
    %841 = vst [vmem:[#allocation5 + $0x990] sm:$0xff] %v329
    %842 = vst [vmem:[#allocation5 + $0x998] sm:$0xff] %v330
    %843 = vst [vmem:[#allocation5 + $0x9a0] sm:$0xff] %v331
    %844 = vst [vmem:[#allocation5 + $0x9a8] sm:$0xff] %v332
    %845 = vst [vmem:[#allocation5 + $0x9b0] sm:$0xff] %v333
    %846 = vst [vmem:[#allocation5 + $0x9b8] sm:$0xff] %v334
    %847 = vst [vmem:[#allocation5 + $0x9c0] sm:$0xff] %v335
    %848 = vst [vmem:[#allocation5 + $0x9c8] sm:$0xff] %v336
    %849 = vst [vmem:[#allocation5 + $0x9d0] sm:$0xff] %v337
    %850 = vst [vmem:[#allocation5 + $0x9d8] sm:$0xff] %v338
    %851 = vst [vmem:[#allocation5 + $0x9e0] sm:$0xff] %v339
    %852 = vst [vmem:[#allocation5 + $0x9e8] sm:$0xff] %v340
    %853 = vst [vmem:[#allocation5 + $0x9f0] sm:$0xff] %v341
    %854 = vst [vmem:[#allocation5 + $0x9f8] sm:$0xff] %v342
    %855 = vst [vmem:[#allocation5 + $0xa00] sm:$0xff] %v343
    %856 = vst [vmem:[#allocation5 + $0xa08] sm:$0xff] %v344
    %857 = vst [vmem:[#allocation5 + $0xa10] sm:$0xff] %v345
    %858 = vst [vmem:[#allocation5 + $0xa18] sm:$0xff] %v346
    %859 = vst [vmem:[#allocation5 + $0xa20] sm:$0xff] %v347
    %860 = vst [vmem:[#allocation5 + $0xa28] sm:$0xff] %v348
    %861 = vst [vmem:[#allocation5 + $0xa30] sm:$0xff] %v349
    %862 = vst [vmem:[#allocation5 + $0xa38] sm:$0xff] %v350
    %863 = vst [vmem:[#allocation5 + $0xa40] sm:$0xff] %v351
    %864 = vst [vmem:[#allocation5 + $0xa48] sm:$0xff] %v352
    %865 = vst [vmem:[#allocation5 + $0xa50] sm:$0xff] %v353
    %866 = vst [vmem:[#allocation5 + $0xa58] sm:$0xff] %v354
    %867 = vst [vmem:[#allocation5 + $0xa60] sm:$0xff] %v355
    %868 = vst [vmem:[#allocation5 + $0xa68] sm:$0xff] %v356
    %869 = vst [vmem:[#allocation5 + $0xa70] sm:$0xff] %v357
    %870 = vst [vmem:[#allocation5 + $0xa78] sm:$0xff] %v358
    %871 = vst [vmem:[#allocation5 + $0xa80] sm:$0xff] %v359
    %872 = vst [vmem:[#allocation5 + $0xa88] sm:$0xff] %v360
    %873 = vst [vmem:[#allocation5 + $0xa90] sm:$0xff] %v361
    %874 = vst [vmem:[#allocation5 + $0xa98] sm:$0xff] %v362
    %875 = vst [vmem:[#allocation5 + $0xaa0] sm:$0xff] %v363
    %876 = vst [vmem:[#allocation5 + $0xaa8] sm:$0xff] %v364
    %877 = vst [vmem:[#allocation5 + $0xab0] sm:$0xff] %v365
    %878 = vst [vmem:[#allocation5 + $0xab8] sm:$0xff] %v366
    %879 = vst [vmem:[#allocation5 + $0xac0] sm:$0xff] %v367
    %880 = vst [vmem:[#allocation5 + $0xac8] sm:$0xff] %v368
    %881 = vst [vmem:[#allocation5 + $0xad0] sm:$0xff] %v369
    %882 = vst [vmem:[#allocation5 + $0xad8] sm:$0xff] %v370
    %883 = vst [vmem:[#allocation5 + $0xae0] sm:$0xff] %v371
    %884 = vst [vmem:[#allocation5 + $0xae8] sm:$0xff] %v372
    %885 = vst [vmem:[#allocation5 + $0xaf0] sm:$0xff] %v373
    %886 = vst [vmem:[#allocation5 + $0xaf8] sm:$0xff] %v374
    %887 = vst [vmem:[#allocation5 + $0xb00] sm:$0xff] %v375
    %888 = vst [vmem:[#allocation5 + $0xb08] sm:$0xff] %v376
    %889 = vst [vmem:[#allocation5 + $0xb10] sm:$0xff] %v377
    %890 = vst [vmem:[#allocation5 + $0xb18] sm:$0xff] %v378
    %891 = vst [vmem:[#allocation5 + $0xb20] sm:$0xff] %v379
    %892 = vst [vmem:[#allocation5 + $0xb28] sm:$0xff] %v380
    %893 = vst [vmem:[#allocation5 + $0xb30] sm:$0xff] %v381
    %894 = vst [vmem:[#allocation5 + $0xb38] sm:$0xff] %v382
    %895 = vst [vmem:[#allocation5 + $0xb40] sm:$0xff] %v383
    %896 = vst [vmem:[#allocation5 + $0xb48] sm:$0xff] %v384
    %897 = vst [vmem:[#allocation5 + $0xb50] sm:$0xff] %v385
    %898 = vst [vmem:[#allocation5 + $0xb58] sm:$0xff] %v386
    %899 = vst [vmem:[#allocation5 + $0xb60] sm:$0xff] %v387
    %900 = vst [vmem:[#allocation5 + $0xb68] sm:$0xff] %v388
    %901 = vst [vmem:[#allocation5 + $0xb70] sm:$0xff] %v389
    %902 = vst [vmem:[#allocation5 + $0xb78] sm:$0xff] %v390
    %903 = vst [vmem:[#allocation5 + $0xb80] sm:$0xff] %v391
    %904 = vst [vmem:[#allocation5 + $0xb88] sm:$0xff] %v392
    %905 = vst [vmem:[#allocation5 + $0xb90] sm:$0xff] %v393
    %906 = vst [vmem:[#allocation5 + $0xb98] sm:$0xff] %v394
    %907 = vst [vmem:[#allocation5 + $0xba0] sm:$0xff] %v395
    %908 = vst [vmem:[#allocation5 + $0xba8] sm:$0xff] %v396
    %909 = vst [vmem:[#allocation5 + $0xbb0] sm:$0xff] %v397
    %910 = vst [vmem:[#allocation5 + $0xbb8] sm:$0xff] %v398
    %911 = vst [vmem:[#allocation5 + $0xbc0] sm:$0xff] %v399
    %912 = vst [vmem:[#allocation5 + $0xbc8] sm:$0xff] %v400
    %913 = vst [vmem:[#allocation5 + $0xbd0] sm:$0xff] %v401
    %914 = vst [vmem:[#allocation5 + $0xbd8] sm:$0xff] %v402
    %915 = vst [vmem:[#allocation5 + $0xbe0] sm:$0xff] %v403
    %916 = vst [vmem:[#allocation5 + $0xbe8] sm:$0xff] %v404
    %917 = vst [vmem:[#allocation5 + $0xbf0] sm:$0xff] %v405
    %918 = vst [vmem:[#allocation5 + $0xbf8] sm:$0xff] %v406
    %919 = vst [vmem:[#allocation5 + $0xc00] sm:$0xff] %v407
    %920 = vst [vmem:[#allocation5 + $0xc08] sm:$0xff] %v408
    %921 = vst [vmem:[#allocation5 + $0xc10] sm:$0xff] %v409
    %922 = vst [vmem:[#allocation5 + $0xc18] sm:$0xff] %v410
    %923 = vst [vmem:[#allocation5 + $0xc20] sm:$0xff] %v411
    %924 = vst [vmem:[#allocation5 + $0xc28] sm:$0xff] %v412
    %925 = vst [vmem:[#allocation5 + $0xc30] sm:$0xff] %v413
    %926 = vst [vmem:[#allocation5 + $0xc38] sm:$0xff] %v414
    %927 = vst [vmem:[#allocation5 + $0xc40] sm:$0xff] %v415
    %928 = vst [vmem:[#allocation5 + $0xc48] sm:$0xff] %v416
    %929 = vst [vmem:[#allocation5 + $0xc50] sm:$0xff] %v417
    %930 = vst [vmem:[#allocation5 + $0xc58] sm:$0xff] %v418
    %931 = vst [vmem:[#allocation5 + $0xc60] sm:$0xff] %v419
    %932 = vst [vmem:[#allocation5 + $0xc68] sm:$0xff] %v420
    %933 = vst [vmem:[#allocation5 + $0xc70] sm:$0xff] %v421
    %934 = vst [vmem:[#allocation5 + $0xc78] sm:$0xff] %v422
    %935 = vst [vmem:[#allocation5 + $0xc80] sm:$0xff] %v423
    %936 = vst [vmem:[#allocation5 + $0xc88] sm:$0xff] %v424
    %937 = vst [vmem:[#allocation5 + $0xc90] sm:$0xff] %v425
    %938 = vst [vmem:[#allocation5 + $0xc98] sm:$0xff] %v426
    %939 = vst [vmem:[#allocation5 + $0xca0] sm:$0xff] %v427
    %940 = vst [vmem:[#allocation5 + $0xca8] sm:$0xff] %v428
    %941 = vst [vmem:[#allocation5 + $0xcb0] sm:$0xff] %v429
    %942 = vst [vmem:[#allocation5 + $0xcb8] sm:$0xff] %v430
    %943 = vst [vmem:[#allocation5 + $0xcc0] sm:$0xff] %v431
    %944 = vst [vmem:[#allocation5 + $0xcc8] sm:$0xff] %v432
    %945 = vst [vmem:[#allocation5 + $0xcd0] sm:$0xff] %v433
    %946 = vst [vmem:[#allocation5 + $0xcd8] sm:$0xff] %v434
    %947 = vst [vmem:[#allocation5 + $0xce0] sm:$0xff] %v435
    %948 = vst [vmem:[#allocation5 + $0xce8] sm:$0xff] %v436
    %949 = vst [vmem:[#allocation5 + $0xcf0] sm:$0xff] %v437
    %950 = vst [vmem:[#allocation5 + $0xcf8] sm:$0xff] %v438
    %951 = vst [vmem:[#allocation5 + $0xd00] sm:$0xff] %v439
    %952 = vst [vmem:[#allocation5 + $0xd08] sm:$0xff] %v440
    %953 = vst [vmem:[#allocation5 + $0xd10] sm:$0xff] %v441
    %954 = vst [vmem:[#allocation5 + $0xd18] sm:$0xff] %v442
    %955 = vst [vmem:[#allocation5 + $0xd20] sm:$0xff] %v443
    %956 = vst [vmem:[#allocation5 + $0xd28] sm:$0xff] %v444
    %957 = vst [vmem:[#allocation5 + $0xd30] sm:$0xff] %v445
    %958 = vst [vmem:[#allocation5 + $0xd38] sm:$0xff] %v446
    %959 = vst [vmem:[#allocation5 + $0xd40] sm:$0xff] %v447
    %960 = vst [vmem:[#allocation5 + $0xd48] sm:$0xff] %v448
    %961 = vst [vmem:[#allocation5 + $0xd50] sm:$0xff] %v449
    %962 = vst [vmem:[#allocation5 + $0xd58] sm:$0xff] %v450
    %963 = vst [vmem:[#allocation5 + $0xd60] sm:$0xff] %v451
    %964 = vst [vmem:[#allocation5 + $0xd68] sm:$0xff] %v452
    %965 = vst [vmem:[#allocation5 + $0xd70] sm:$0xff] %v453
    %966 = vst [vmem:[#allocation5 + $0xd78] sm:$0xff] %v454
    %967 = vst [vmem:[#allocation5 + $0xd80] sm:$0xff] %v455
    %968 = vst [vmem:[#allocation5 + $0xd88] sm:$0xff] %v456
    %969 = vst [vmem:[#allocation5 + $0xd90] sm:$0xff] %v457
    %970 = vst [vmem:[#allocation5 + $0xd98] sm:$0xff] %v458
    %971 = vst [vmem:[#allocation5 + $0xda0] sm:$0xff] %v459
    %972 = vst [vmem:[#allocation5 + $0xda8] sm:$0xff] %v460
    %973 = vst [vmem:[#allocation5 + $0xdb0] sm:$0xff] %v461
    %974 = vst [vmem:[#allocation5 + $0xdb8] sm:$0xff] %v462
    %975 = vst [vmem:[#allocation5 + $0xdc0] sm:$0xff] %v463
    %976 = vst [vmem:[#allocation5 + $0xdc8] sm:$0xff] %v464
    %977 = vst [vmem:[#allocation5 + $0xdd0] sm:$0xff] %v465
    %978 = vst [vmem:[#allocation5 + $0xdd8] sm:$0xff] %v466
    %979 = vst [vmem:[#allocation5 + $0xde0] sm:$0xff] %v467
    %980 = vst [vmem:[#allocation5 + $0xde8] sm:$0xff] %v468
    %981 = vst [vmem:[#allocation5 + $0xdf0] sm:$0xff] %v469
    %982 = vst [vmem:[#allocation5 + $0xdf8] sm:$0xff] %v470
    %983 = vst [vmem:[#allocation5 + $0xe00] sm:$0xff] %v471
    %984 = vst [vmem:[#allocation5 + $0xe08] sm:$0xff] %v472
    %985 = vst [vmem:[#allocation5 + $0xe10] sm:$0xff] %v473
    %986 = vst [vmem:[#allocation5 + $0xe18] sm:$0xff] %v474
    %987 = vst [vmem:[#allocation5 + $0xe20] sm:$0xff] %v475
    %988 = vst [vmem:[#allocation5 + $0xe28] sm:$0xff] %v476
    %989 = vst [vmem:[#allocation5 + $0xe30] sm:$0xff] %v477
    %990 = vst [vmem:[#allocation5 + $0xe38] sm:$0xff] %v478
    %991 = vst [vmem:[#allocation5 + $0xe40] sm:$0xff] %v479
    %992 = vst [vmem:[#allocation5 + $0xe48] sm:$0xff] %v480
    %993 = vst [vmem:[#allocation5 + $0xe50] sm:$0xff] %v481
    %994 = vst [vmem:[#allocation5 + $0xe58] sm:$0xff] %v482
    %995 = vst [vmem:[#allocation5 + $0xe60] sm:$0xff] %v483
    %996 = vst [vmem:[#allocation5 + $0xe68] sm:$0xff] %v484
    %997 = vst [vmem:[#allocation5 + $0xe70] sm:$0xff] %v485
    %998 = vst [vmem:[#allocation5 + $0xe78] sm:$0xff] %v486
    %999 = vst [vmem:[#allocation5 + $0xe80] sm:$0xff] %v487
    %1000 = vst [vmem:[#allocation5 + $0xe88] sm:$0xff] %v488
    %1001 = vst [vmem:[#allocation5 + $0xe90] sm:$0xff] %v489
    %1002 = vst [vmem:[#allocation5 + $0xe98] sm:$0xff] %v490
    %1003 = vst [vmem:[#allocation5 + $0xea0] sm:$0xff] %v491
    %1004 = vst [vmem:[#allocation5 + $0xea8] sm:$0xff] %v492
    %1005 = vst [vmem:[#allocation5 + $0xeb0] sm:$0xff] %v493
    %1006 = vst [vmem:[#allocation5 + $0xeb8] sm:$0xff] %v494
    %1007 = vst [vmem:[#allocation5 + $0xec0] sm:$0xff] %v495
    %1008 = vst [vmem:[#allocation5 + $0xec8] sm:$0xff] %v496
    %1009 = vst [vmem:[#allocation5 + $0xed0] sm:$0xff] %v497
    %1010 = vst [vmem:[#allocation5 + $0xed8] sm:$0xff] %v498
    %1011 = vst [vmem:[#allocation5 + $0xee0] sm:$0xff] %v499
    %1012 = vst [vmem:[#allocation5 + $0xee8] sm:$0xff] %v500
    %1013 = vst [vmem:[#allocation5 + $0xef0] sm:$0xff] %v501
    %1014 = vst [vmem:[#allocation5 + $0xef8] sm:$0xff] %v502
    %1015 = vst [vmem:[#allocation5 + $0xf00] sm:$0xff] %v503
    %1016 = vst [vmem:[#allocation5 + $0xf08] sm:$0xff] %v504
    %1017 = vst [vmem:[#allocation5 + $0xf10] sm:$0xff] %v505
    %1018 = vst [vmem:[#allocation5 + $0xf18] sm:$0xff] %v506
    %1019 = vst [vmem:[#allocation5 + $0xf20] sm:$0xff] %v507
    %1020 = vst [vmem:[#allocation5 + $0xf28] sm:$0xff] %v508
    %1021 = vst [vmem:[#allocation5 + $0xf30] sm:$0xff] %v509
    %1022 = vst [vmem:[#allocation5 + $0xf38] sm:$0xff] %v510
    %1023 = vst [vmem:[#allocation5 + $0xf40] sm:$0xff] %v511
    %1024 = vst [vmem:[#allocation5 + $0xf48] sm:$0xff] %v512
    %1025 = vst [vmem:[#allocation5 + $0xf50] sm:$0xff] %v513
    %1026 = vst [vmem:[#allocation5 + $0xf58] sm:$0xff] %v514
    %1027 = vst [vmem:[#allocation5 + $0xf60] sm:$0xff] %v515
    %1028 = vst [vmem:[#allocation5 + $0xf68] sm:$0xff] %v516
    %1029 = vst [vmem:[#allocation5 + $0xf70] sm:$0xff] %v517
    %1030 = vst [vmem:[#allocation5 + $0xf78] sm:$0xff] %v518
    %1031 = vst [vmem:[#allocation5 + $0xf80] sm:$0xff] %v519
    %1032 = vst [vmem:[#allocation5 + $0xf88] sm:$0xff] %v520
    %1033 = vst [vmem:[#allocation5 + $0xf90] sm:$0xff] %v521
    %1034 = vst [vmem:[#allocation5 + $0xf98] sm:$0xff] %v522
    %1035 = vst [vmem:[#allocation5 + $0xfa0] sm:$0xff] %v523
    %1036 = vst [vmem:[#allocation5 + $0xfa8] sm:$0xff] %v524
    %1037 = vst [vmem:[#allocation5 + $0xfb0] sm:$0xff] %v525
    %1038 = vst [vmem:[#allocation5 + $0xfb8] sm:$0xff] %v526
    %1039 = vst [vmem:[#allocation5 + $0xfc0] sm:$0xff] %v527
    %1040 = vst [vmem:[#allocation5 + $0xfc8] sm:$0xff] %v528
    %1041 = vst [vmem:[#allocation5 + $0xfd0] sm:$0xff] %v529
    %1042 = vst [vmem:[#allocation5 + $0xfd8] sm:$0xff] %v530
    %1043 = vst [vmem:[#allocation5 + $0xfe0] sm:$0xff] %v531
    %1044 = vst [vmem:[#allocation5 + $0xfe8] sm:$0xff] %v532
    %1045 = vst [vmem:[#allocation5 + $0xff0] sm:$0xff] %v533
    %1046 = vst [vmem:[#allocation5 + $0xff8] sm:$0xff] %v534
    // Predicated region
    $region10: #{tpu_custom_call.1} parent=1 // pred_check
      _
    $region11: #{tpu_custom_call.1} parent=1 // pred_check_branch
      %1048 = sbr.rel (0) target = $region13
    $region12: #{tpu_custom_call.1} parent=1 // pred_region
      %s1050 = ssub.s32 65536, 65536
      %1051 = vsyncadd [#allocation4], %s1050
      %s1052 = sshll.u32 [#allocation5], 4
      %s1053 = int_to_ptr.vmem [resolvable:$true] %s1052
      %1058 = dma.vmem_to_hbm [thread:$0]  %s1053, 65536, %s1, [#allocation4], 8192, 8192, 512
    $region13: #{tpu_custom_call.1} parent=1 // pred_fallthru
      _
    // Predicated region
    $region14: #{tpu_custom_call.1} parent=1 // pred_check
      _
    $region15: #{tpu_custom_call.1} parent=1 // pred_check_branch
      %1060 = sbr.rel (0) target = $region17
    $region16: #{tpu_custom_call.1} parent=1 // pred_region
      %1061 = dma.done [#allocation4], 65536
    $region17: #{tpu_custom_call.1} parent=1 // pred_fallthru
      _
    %1062 = vsyncpa [#allocation3], 1
    %1063 = vsyncpa [#allocation4], 1

</llo_original>
